<compile_context>
chip_gen: v7x
topology: tpu7x:2x2x1
jax: 0.10.0
libtpu: 0.0.40
codegen_flags: <defaults>
</compile_context>

<pallas_src>
import functools
import math

import jax
import jax.numpy as jnp
from jax.experimental import pallas as pl
from jax.experimental.pallas import tpu as pltpu

# Pure Python float so it is inlined as a literal (matches np.finfo(np.float32).min used by
# the PyTorch _masked_softmax).  Do NOT replace with -inf.
NEG_INF = -3.4028235e38


def _layer_norm(x, gain, bias, eps=1e-6):
    # Matches `Normalize`: unbiased variance (ddof=1); eps inside sqrt AND added to sigma.
    # Mean/variance from sum(x) and sum(x*x) (two independent lane reductions, one pass
    # over x); clamp guards against tiny negative variance from cancellation.
    n = x.shape[-1]
    s1 = jnp.sum(x, axis=-1, keepdims=True)
    s2 = jnp.sum(x * x, axis=-1, keepdims=True)
    mu = s1 * (1.0 / n)
    var = jnp.maximum(s2 - s1 * mu, 0.0) * (1.0 / (n - 1))
    sigma = jnp.sqrt(var + eps)
    return gain * (x - mu) / (sigma + eps) + bias


def global_module_kernel(h_V_ref, h_E_ref, mask_attend_ref, mask_V_ref,
                         seg_ref, segT_ref,
                         wq_ref, wk_ref, wv_ref, wo_ref,
                         g0_ref, b0_ref, g1_ref, b1_ref,
                         win_ref, bin_ref, wout_ref, bout_ref,
                         out_ref, *, num_heads, nbr_k):
    x = h_V_ref[0]              # (tn, H)      f32
    hE = h_E_ref[0]             # (tn*K, C)    f32, pre-flattened (lane-dense) in the wrapper
    mask = mask_attend_ref[0]   # (tn, K)      0/1
    mask_v = mask_V_ref[0]      # (tn, 1)      0/1

    tn, H = x.shape
    K = nbr_k
    d = H // num_heads
    scale = 1.0 / math.sqrt(d)

    # ---------------- NeighborAttention ----------------
    # Projections: plain 2-D MXU matmuls with f32 accumulation.
    Q = jnp.dot(x, wq_ref[...], preferred_element_type=jnp.float32)        # (tn, H)
    Kmat = jnp.dot(hE, wk_ref[...], preferred_element_type=jnp.float32)    # (tn*K, H)
    Vmat = jnp.dot(hE, wv_ref[...], preferred_element_type=jnp.float32)    # (tn*K, H)

    Kmat3 = Kmat.reshape(tn, K, H)
    Vmat3 = Vmat.reshape(tn, K, H)

    # Per-head Q.K^T without 4-D dot_generals / minor-dim reshapes: elementwise Q*K (VPU)
    # followed by a (H, heads) block-indicator matmul that sums each head's d-slice of lanes.
    prod = Q[:, None, :] * Kmat3                                           # (tn, K, H)
    logits = jnp.dot(prod.reshape(tn * K, H), seg_ref[...],
                     preferred_element_type=jnp.float32)
    logits = logits.reshape(tn, K, num_heads) * scale                      # (tn, K, heads)

    # Masked softmax over the K neighbors.  Exactly mirrors PyTorch _masked_softmax:
    # where-select to float32-min, softmax, then re-mask (fully masked rows -> 0, no NaNs).
    mask3 = mask[:, :, None]                                               # (tn, K, 1)
    logits = jnp.where(mask3 > 0, logits, NEG_INF)
    logits = logits - jnp.max(logits, axis=1, keepdims=True)
    e = jnp.exp(logits)
    attend = e / jnp.sum(e, axis=1, keepdims=True)                         # exact divide
    attend = attend * mask3                                                # (tn, K, heads)

    # Per-head weighted sum of V: expand each head weight across its d lanes with the
    # transposed indicator (heads, H), multiply elementwise, reduce over K.
    attend_lanes = jnp.dot(attend.reshape(tn * K, num_heads), segT_ref[...],
                           preferred_element_type=jnp.float32)             # (tn*K, H)
    h_update = jnp.sum(attend_lanes.reshape(tn, K, H) * Vmat3, axis=1)     # (tn, H)
    dh = jnp.dot(h_update, wo_ref[...], preferred_element_type=jnp.float32)

    # residual + norm[0]   (dropout = identity in eval mode)
    hv = _layer_norm(x + dh, g0_ref[0], b0_ref[0])

    # ---------------- PositionWiseFeedForward ----------------
    ff = jnp.maximum(
        jnp.dot(hv, win_ref[...], preferred_element_type=jnp.float32) + bin_ref[0], 0.0)
    dh2 = jnp.dot(ff, wout_ref[...], preferred_element_type=jnp.float32) + bout_ref[0]

    # residual + norm[1], then node mask
    hv = _layer_norm(hv + dh2, g1_ref[0], b1_ref[0])
    out_ref[0] = (mask_v * hv).astype(out_ref.dtype)


def _pick_block_n(N, B, K, C, H, F, num_heads, budget_bytes):
    """Largest node tile whose estimated VMEM footprint (double-buffered pipelined blocks
    + in-kernel intermediates, with lane padding) fits the budget, while exposing >= 2
    parallel grid steps for 2-TensorCore chips when possible."""
    pad = lambda v, m: ((v + m - 1) // m) * m
    lane = lambda v: max(pad(v, 128), 128)
    Cp, Hp, Fp, Kp = lane(C), lane(H), lane(F), lane(K)
    hp = lane(num_heads)
    wbytes = 4 * (2 * Hp * Hp + 2 * Cp * Hp + Hp * Fp + Fp * Hp + 6 * Hp
                  + Hp * hp + hp * Hp)                      # weights + indicators (fetched once)

    def est(bn):
        r = pad(bn, 8)
        rK = pad(bn * K, 8)
        io = 2 * 4 * (rK * Cp + r * Hp + r * Kp + r * 128 + r * Hp)  # 2x-buffered in/out blocks
        mid = 4 * (5 * rK * Hp            # Kmat, Vmat, prod, attend_lanes, weighted
                   + 2 * rK * hp          # logits, attend (heads lane-padded)
                   + 8 * r * Hp           # Q, h_update, dh, hv, residuals, out staging
                   + 2 * r * Fp)          # FFN hidden (pre/post ReLU)
        return io + mid + wbytes

    cands = sorted({v for v in range(1, N + 1)
                    if N % v == 0 and (v == N or v % 8 == 0)}, reverse=True)
    bn = next((v for v in cands if est(v) <= budget_bytes), cands[-1])
    if B * (N // bn) < 2:                 # keep both TensorCores busy on v7x-class chips
        smaller = [v for v in cands if v < bn]
        if smaller:
            bn = smaller[0]
    return bn, est(bn)


def global_module_forward(h_V, h_E, mask_attend, mask_V, params, num_heads=4,
                          block_n=None, vmem_budget_bytes=28 << 20,
                          vmem_limit_bytes=None):
    B, N, H = h_V.shape
    K, C = h_E.shape[2], h_E.shape[3]
    Fdim = params["W_in"].shape[1]
    assert H % num_heads == 0
    d = H // num_heads

    auto_bn, est_bytes = _pick_block_n(N, B, K, C, H, Fdim, num_heads, vmem_budget_bytes)
    if block_n is None:
        block_n = auto_bn
    assert N % block_n == 0 and (block_n == N or block_n % 8 == 0), \
        "block_n must divide N and be a multiple of 8 (or equal N)"
    n_tiles = N // block_n
    if vmem_limit_bytes is None:
        # Raise the scoped-VMEM limit only as far as the budgeted tile needs (v5e default is
        # 16 MiB, v6e/v7x 32 MiB); never above 48 MiB so it is safe on v7x's 64 MiB VMEM.
        vmem_limit_bytes = int(min(48 << 20, max(32 << 20, 2 * est_bytes)))

    # Wrapper-side layout plumbing only (no dtype conversion: an unfused bf16 cast of h_E
    # would ADD HBM traffic -- accept bf16 here only if the producer already emits it).
    h_E_flat = jnp.asarray(h_E).reshape(B, N * K, C)
    mask_V3 = mask_V[..., None]                                   # (B, N, 1)

    # (H, heads) block-indicator matrix for per-head lane reduction / expansion.
    lane_idx = jnp.arange(H, dtype=jnp.int32)[:, None]
    head_idx = jnp.arange(num_heads, dtype=jnp.int32)[None, :]
    seg = (lane_idx // d == head_idx).astype(jnp.float32)         # (H, heads)
    segT = seg.T                                                  # (heads, H)

    kernel = functools.partial(global_module_kernel, num_heads=num_heads, nbr_k=K)

    def rep(shape):
        return pl.BlockSpec(shape, lambda b, i: (0,) * len(shape))

    # Advisory cost estimate so XLA can schedule around the custom call.
    flops = int(2 * B * N * (H * H + 2 * K * C * H + K * H * (2 + 2 * num_heads)
                             + K * H + H * H + 2 * H * Fdim))
    transcendentals = int(B * N * (K * num_heads + 2))
    bytes_accessed = int(4 * (h_V.size + h_E_flat.size + mask_attend.size + mask_V3.size
                              + B * N * H)
                         + sum(int(jnp.asarray(v).size) * 4 for v in params.values()))
    cost = pl.CostEstimate(flops=flops, transcendentals=transcendentals,
                           bytes_accessed=bytes_accessed)

    return pl.pallas_call(
        kernel,
        out_shape=jax.ShapeDtypeStruct((B, N, H), jnp.float32),
        grid=(B, n_tiles),
        in_specs=[
            pl.BlockSpec((1, block_n, H), lambda b, i: (b, i, 0)),
            pl.BlockSpec((1, block_n * K, C), lambda b, i: (b, i, 0)),
            pl.BlockSpec((1, block_n, K), lambda b, i: (b, i, 0)),
            pl.BlockSpec((1, block_n, 1), lambda b, i: (b, i, 0)),
            rep((H, num_heads)), rep((num_heads, H)),
            rep((H, H)), rep((C, H)), rep((C, H)), rep((H, H)),
            rep((1, H)), rep((1, H)), rep((1, H)), rep((1, H)),
            rep((H, Fdim)), rep((1, Fdim)), rep((Fdim, H)), rep((1, H)),
        ],
        out_specs=pl.BlockSpec((1, block_n, H), lambda b, i: (b, i, 0)),
        compiler_params=pltpu.CompilerParams(
            dimension_semantics=("parallel", "parallel"),
            vmem_limit_bytes=vmem_limit_bytes),
        cost_estimate=cost,
    )(h_V, h_E_flat, mask_attend, mask_V3, seg, segT,
      params["W_Q"], params["W_K"], params["W_V"], params["W_O"],
      params["g0"], params["b0"], params["g1"], params["b1"],
      params["W_in"], params["b_in"], params["W_out"], params["b_out"])


def ref_forward(h_V, h_E, mask_attend, mask_V, params, num_heads=4):
    """Pure-JAX reference mirroring the PyTorch forward (for correctness check)."""
    B, N, H = h_V.shape
    K = h_E.shape[2]
    d = H // num_heads
    Q = (h_V @ params["W_Q"]).reshape(B, N, num_heads, d)
    Km = (h_E @ params["W_K"]).reshape(B, N, K, num_heads, d)
    Vm = (h_E @ params["W_V"]).reshape(B, N, K, num_heads, d)
    logits = jnp.einsum("bnhd,bnkhd->bnhk", Q, Km) / math.sqrt(d)
    mask = mask_attend[:, :, None, :]
    logits = jnp.where(mask > 0, logits, NEG_INF)
    attend = jax.nn.softmax(logits, axis=-1) * mask
    upd = jnp.einsum("bnhk,bnkhd->bnhd", attend, Vm).reshape(B, N, H)
    dh = upd @ params["W_O"]

    def ln(x, g, b, eps=1e-6):
        mu = x.mean(-1, keepdims=True)
        var = jnp.sum((x - mu) ** 2, -1, keepdims=True) / (x.shape[-1] - 1)
        return g * (x - mu) / (jnp.sqrt(var + eps) + eps) + b

    hv = ln(h_V + dh, params["g0"][0], params["b0"][0])
    ff = jax.nn.relu(hv @ params["W_in"] + params["b_in"][0])
    dh2 = ff @ params["W_out"] + params["b_out"][0]
    hv = ln(hv + dh2, params["g1"][0], params["b1"][0])
    return mask_V[..., None] * hv


if __name__ == "__main__":
    HEADS = 4

    def make_inputs(key, B, N, K, H, C):
        FF = 4 * H
        ks = jax.random.split(key, 12)
        s = 0.1
        params = {
            "W_Q": s * jax.random.normal(ks[0], (H, H), jnp.float32),
            "W_K": s * jax.random.normal(ks[1], (C, H), jnp.float32),
            "W_V": s * jax.random.normal(ks[2], (C, H), jnp.float32),
            "W_O": s * jax.random.normal(ks[3], (H, H), jnp.float32),
            "g0": jnp.ones((1, H), jnp.float32),
            "b0": jnp.zeros((1, H), jnp.float32),
            "g1": jnp.ones((1, H), jnp.float32),
            "b1": jnp.zeros((1, H), jnp.float32),
            "W_in": s * jax.random.normal(ks[4], (H, FF), jnp.float32),
            "b_in": s * jax.random.normal(ks[5], (1, FF), jnp.float32),
            "W_out": s * jax.random.normal(ks[6], (FF, H), jnp.float32),
            "b_out": s * jax.random.normal(ks[7], (1, H), jnp.float32),
        }
        h_V = jax.random.normal(ks[8], (B, N, H), jnp.float32)
        h_E = jax.random.normal(ks[9], (B, N, K, C), jnp.float32)
        mask_attend = jax.random.bernoulli(ks[10], 0.7, (B, N, K)).astype(jnp.float32)
        mask_attend = mask_attend.at[:, :, 0].set(1.0)   # >= 1 unmasked neighbor per node
        mask_V = jax.random.bernoulli(ks[11], 0.8, (B, N)).astype(jnp.float32)
        return params, h_V, h_E, mask_attend, mask_V

    # Kernel math is now exactly the reference math (no approximate reciprocals); the
    # tolerance only covers possible MXU f32-matmul pass differences between Mosaic and
    # the XLA reference on hardware.
    RTOL = ATOL = 2e-2

    key = jax.random.PRNGKey(0)
    k1, k2 = jax.random.split(key)

    # Case 1: single node-tile per batch (B=2, N=8, K=8, H=32, C=32), grid (2, 1).
    params, h_V, h_E, mask_attend, mask_V = make_inputs(k1, 2, 8, 8, 32, 32)
    ref = ref_forward(h_V, h_E, mask_attend, mask_V, params, num_heads=HEADS)
    out = jax.block_until_ready(
        global_module_forward(h_V, h_E, mask_attend, mask_V, params, num_heads=HEADS))
    assert jnp.allclose(out, ref, rtol=RTOL, atol=ATOL), "Pallas kernel mismatch (single tile)"

    # Case 2: multi-tile grid over nodes (N=64, block_n=16 -> grid (2, 4)) to exercise the
    # node-tiling index maps.
    params, h_V, h_E, mask_attend, mask_V = make_inputs(k2, 2, 64, 8, 32, 32)
    ref = ref_forward(h_V, h_E, mask_attend, mask_V, params, num_heads=HEADS)
    out = jax.block_until_ready(
        global_module_forward(h_V, h_E, mask_attend, mask_V, params,
                              num_heads=HEADS, block_n=16))
    assert jnp.allclose(out, ref, rtol=RTOL, atol=ATOL), "Pallas kernel mismatch (multi tile)"

    print("KERNEL_OK")
</pallas_src>

<mosaic_0001>
module attributes {stable_mosaic.version = 11 : i64} {
  func.func @global_module_kernel(%arg0: i32, %arg1: i32, %arg2: memref<1x8x32xf32, #tpu.memory_space<vmem>>, %arg3: memref<1x64x32xf32, #tpu.memory_space<vmem>>, %arg4: memref<1x8x8xf32, #tpu.memory_space<vmem>>, %arg5: memref<1x8x1xf32, #tpu.memory_space<vmem>>, %arg6: memref<32x4xf32, #tpu.memory_space<vmem>>, %arg7: memref<4x32xf32, #tpu.memory_space<vmem>>, %arg8: memref<32x32xf32, #tpu.memory_space<vmem>>, %arg9: memref<32x32xf32, #tpu.memory_space<vmem>>, %arg10: memref<32x32xf32, #tpu.memory_space<vmem>>, %arg11: memref<32x32xf32, #tpu.memory_space<vmem>>, %arg12: memref<1x32xf32, #tpu.memory_space<vmem>>, %arg13: memref<1x32xf32, #tpu.memory_space<vmem>>, %arg14: memref<1x32xf32, #tpu.memory_space<vmem>>, %arg15: memref<1x32xf32, #tpu.memory_space<vmem>>, %arg16: memref<32x128xf32, #tpu.memory_space<vmem>>, %arg17: memref<1x128xf32, #tpu.memory_space<vmem>>, %arg18: memref<128x32xf32, #tpu.memory_space<vmem>>, %arg19: memref<1x32xf32, #tpu.memory_space<vmem>>, %arg20: memref<1x8x32xf32, #tpu.memory_space<vmem>>) attributes {dimension_semantics = [#tpu.dimension_semantics<parallel>, #tpu.dimension_semantics<parallel>], iteration_bounds = array<i64: 2, 1>, scalar_prefetch = 0 : i64, scratch_operands = 0 : i64, tpu.core_type = #tpu.core_type<tc>, window_params = [{transform_indices = @transform_0, window_bounds = array<i64: 1, 8, 32>}, {transform_indices = @transform_1, window_bounds = array<i64: 1, 64, 32>}, {transform_indices = @transform_2, window_bounds = array<i64: 1, 8, 8>}, {transform_indices = @transform_3, window_bounds = array<i64: 1, 8, 1>}, {pipeline_mode = #tpu.pipeline_mode<synchronous>, transform_indices = @transform_4, window_bounds = array<i64: 32, 4>}, {pipeline_mode = #tpu.pipeline_mode<synchronous>, transform_indices = @transform_5, window_bounds = array<i64: 4, 32>}, {pipeline_mode = #tpu.pipeline_mode<synchronous>, transform_indices = @transform_6, window_bounds = array<i64: 32, 32>}, {pipeline_mode = #tpu.pipeline_mode<synchronous>, transform_indices = @transform_7, window_bounds = array<i64: 32, 32>}, {pipeline_mode = #tpu.pipeline_mode<synchronous>, transform_indices = @transform_8, window_bounds = array<i64: 32, 32>}, {pipeline_mode = #tpu.pipeline_mode<synchronous>, transform_indices = @transform_9, window_bounds = array<i64: 32, 32>}, {pipeline_mode = #tpu.pipeline_mode<synchronous>, transform_indices = @transform_10, window_bounds = array<i64: 1, 32>}, {pipeline_mode = #tpu.pipeline_mode<synchronous>, transform_indices = @transform_11, window_bounds = array<i64: 1, 32>}, {pipeline_mode = #tpu.pipeline_mode<synchronous>, transform_indices = @transform_12, window_bounds = array<i64: 1, 32>}, {pipeline_mode = #tpu.pipeline_mode<synchronous>, transform_indices = @transform_13, window_bounds = array<i64: 1, 32>}, {pipeline_mode = #tpu.pipeline_mode<synchronous>, transform_indices = @transform_14, window_bounds = array<i64: 32, 128>}, {pipeline_mode = #tpu.pipeline_mode<synchronous>, transform_indices = @transform_15, window_bounds = array<i64: 1, 128>}, {pipeline_mode = #tpu.pipeline_mode<synchronous>, transform_indices = @transform_16, window_bounds = array<i64: 128, 32>}, {pipeline_mode = #tpu.pipeline_mode<synchronous>, transform_indices = @transform_17, window_bounds = array<i64: 1, 32>}, {transform_indices = @transform_18, window_bounds = array<i64: 1, 8, 32>}]} {
    %c0 = arith.constant 0 : index
    %c0_0 = arith.constant 0 : index
    %c0_1 = arith.constant 0 : index
    %0 = vector.load %arg2[%c0, %c0_0, %c0_1] : memref<1x8x32xf32, #tpu.memory_space<vmem>>, vector<1x8x32xf32>
    %1 = vector.shape_cast %0 : vector<1x8x32xf32> to vector<8x32xf32>
    %c0_2 = arith.constant 0 : index
    %c0_3 = arith.constant 0 : index
    %c0_4 = arith.constant 0 : index
    %2 = vector.load %arg3[%c0_2, %c0_3, %c0_4] : memref<1x64x32xf32, #tpu.memory_space<vmem>>, vector<1x64x32xf32>
    %3 = vector.shape_cast %2 : vector<1x64x32xf32> to vector<64x32xf32>
    %c0_5 = arith.constant 0 : index
    %c0_6 = arith.constant 0 : index
    %c0_7 = arith.constant 0 : index
    %4 = vector.load %arg4[%c0_5, %c0_6, %c0_7] : memref<1x8x8xf32, #tpu.memory_space<vmem>>, vector<1x8x8xf32>
    %5 = vector.shape_cast %4 : vector<1x8x8xf32> to vector<8x8xf32>
    %c0_8 = arith.constant 0 : index
    %c0_9 = arith.constant 0 : index
    %c0_10 = arith.constant 0 : index
    %6 = vector.load %arg5[%c0_8, %c0_9, %c0_10] : memref<1x8x1xf32, #tpu.memory_space<vmem>>, vector<1x8x1xf32>
    %7 = vector.shape_cast %6 : vector<1x8x1xf32> to vector<8x1xf32>
    %c0_11 = arith.constant 0 : index
    %c0_12 = arith.constant 0 : index
    %8 = vector.load %arg8[%c0_11, %c0_12] : memref<32x32xf32, #tpu.memory_space<vmem>>, vector<32x32xf32>
    %cst = arith.constant dense<0.000000e+00> : vector<8x32xf32>
    %9 = tpu.matmul %1, %8, %cst {dimension_numbers = #tpu.dot_dimension_numbers<[1], [0], [0], [1], [0, 0, 1, 1], [], []>} : vector<8x32xf32>, vector<32x32xf32>, vector<8x32xf32> -> vector<8x32xf32>
    %c0_13 = arith.constant 0 : index
    %c0_14 = arith.constant 0 : index
    %10 = vector.load %arg9[%c0_13, %c0_14] : memref<32x32xf32, #tpu.memory_space<vmem>>, vector<32x32xf32>
    %cst_15 = arith.constant dense<0.000000e+00> : vector<64x32xf32>
    %11 = tpu.matmul %3, %10, %cst_15 {dimension_numbers = #tpu.dot_dimension_numbers<[1], [0], [0], [1], [0, 0, 1, 1], [], []>} : vector<64x32xf32>, vector<32x32xf32>, vector<64x32xf32> -> vector<64x32xf32>
    %c0_16 = arith.constant 0 : index
    %c0_17 = arith.constant 0 : index
    %12 = vector.load %arg10[%c0_16, %c0_17] : memref<32x32xf32, #tpu.memory_space<vmem>>, vector<32x32xf32>
    %cst_18 = arith.constant dense<0.000000e+00> : vector<64x32xf32>
    %13 = tpu.matmul %3, %12, %cst_18 {dimension_numbers = #tpu.dot_dimension_numbers<[1], [0], [0], [1], [0, 0, 1, 1], [], []>} : vector<64x32xf32>, vector<32x32xf32>, vector<64x32xf32> -> vector<64x32xf32>
    %14 = vector.shape_cast %11 : vector<64x32xf32> to vector<8x8x32xf32>
    %15 = vector.shape_cast %13 : vector<64x32xf32> to vector<8x8x32xf32>
    %16 = vector.shape_cast %9 : vector<8x32xf32> to vector<8x1x32xf32>
    %17 = vector.broadcast %16 : vector<8x1x32xf32> to vector<8x8x32xf32>
    %18 = arith.mulf %17, %14 : vector<8x8x32xf32>
    %19 = vector.shape_cast %18 : vector<8x8x32xf32> to vector<64x32xf32>
    %c0_19 = arith.constant 0 : index
    %c0_20 = arith.constant 0 : index
    %20 = vector.load %arg6[%c0_19, %c0_20] : memref<32x4xf32, #tpu.memory_space<vmem>>, vector<32x4xf32>
    %cst_21 = arith.constant dense<0.000000e+00> : vector<64x4xf32>
    %21 = tpu.matmul %19, %20, %cst_21 {dimension_numbers = #tpu.dot_dimension_numbers<[1], [0], [0], [1], [0, 0, 1, 1], [], []>} : vector<64x32xf32>, vector<32x4xf32>, vector<64x4xf32> -> vector<64x4xf32>
    %22 = vector.shape_cast %21 : vector<64x4xf32> to vector<8x8x4xf32>
    %cst_22 = arith.constant 0.353553385 : f32
    %23 = vector.broadcast %cst_22 : f32 to vector<8x8x4xf32>
    %24 = arith.mulf %22, %23 : vector<8x8x4xf32>
    %25 = vector.shape_cast %5 : vector<8x8xf32> to vector<8x8x1xf32>
    %cst_23 = arith.constant 0.000000e+00 : f32
    %26 = vector.broadcast %cst_23 : f32 to vector<8x8x1xf32>
    %27 = arith.cmpf ogt, %25, %26 : vector<8x8x1xf32>
    %cst_24 = arith.constant -3.40282347E+38 : f32
    %28 = vector.shape_cast %27 : vector<8x8x1xi1> to vector<8x8x1xi1>
    %29 = vector.broadcast %28 : vector<8x8x1xi1> to vector<8x8x4xi1>
    %30 = vector.broadcast %cst_24 : f32 to vector<8x8x4xf32>
    %31 = arith.select %29, %24, %30 : vector<8x8x4xi1>, vector<8x8x4xf32>
    %cst_25 = arith.constant dense<0xFF800000> : vector<8x4xf32>
    %32 = vector.multi_reduction <maximumf>, %31, %cst_25 [1] : vector<8x8x4xf32> to vector<8x4xf32>
    %33 = vector.shape_cast %32 : vector<8x4xf32> to vector<8x1x4xf32>
    %34 = vector.broadcast %33 : vector<8x1x4xf32> to vector<8x8x4xf32>
    %35 = arith.subf %31, %34 : vector<8x8x4xf32>
    %36 = math.exp %35 : vector<8x8x4xf32>
    %cst_26 = arith.constant dense<0.000000e+00> : vector<8x4xf32>
    %37 = vector.multi_reduction <add>, %36, %cst_26 [1] : vector<8x8x4xf32> to vector<8x4xf32>
    %38 = vector.shape_cast %37 : vector<8x4xf32> to vector<8x1x4xf32>
    %39 = vector.broadcast %38 : vector<8x1x4xf32> to vector<8x8x4xf32>
    %40 = arith.divf %36, %39 : vector<8x8x4xf32>
    %41 = vector.broadcast %25 : vector<8x8x1xf32> to vector<8x8x4xf32>
    %42 = arith.mulf %40, %41 : vector<8x8x4xf32>
    %43 = vector.shape_cast %42 : vector<8x8x4xf32> to vector<64x4xf32>
    %c0_27 = arith.constant 0 : index
    %c0_28 = arith.constant 0 : index
    %44 = vector.load %arg7[%c0_27, %c0_28] : memref<4x32xf32, #tpu.memory_space<vmem>>, vector<4x32xf32>
    %cst_29 = arith.constant dense<0.000000e+00> : vector<64x32xf32>
    %45 = tpu.matmul %43, %44, %cst_29 {dimension_numbers = #tpu.dot_dimension_numbers<[1], [0], [0], [1], [0, 0, 1, 1], [], []>} : vector<64x4xf32>, vector<4x32xf32>, vector<64x32xf32> -> vector<64x32xf32>
    %46 = vector.shape_cast %45 : vector<64x32xf32> to vector<8x8x32xf32>
    %47 = arith.mulf %46, %15 : vector<8x8x32xf32>
    %cst_30 = arith.constant dense<0.000000e+00> : vector<8x32xf32>
    %48 = vector.multi_reduction <add>, %47, %cst_30 [1] : vector<8x8x32xf32> to vector<8x32xf32>
    %c0_31 = arith.constant 0 : index
    %c0_32 = arith.constant 0 : index
    %49 = vector.load %arg11[%c0_31, %c0_32] : memref<32x32xf32, #tpu.memory_space<vmem>>, vector<32x32xf32>
    %cst_33 = arith.constant dense<0.000000e+00> : vector<8x32xf32>
    %50 = tpu.matmul %48, %49, %cst_33 {dimension_numbers = #tpu.dot_dimension_numbers<[1], [0], [0], [1], [0, 0, 1, 1], [], []>} : vector<8x32xf32>, vector<32x32xf32>, vector<8x32xf32> -> vector<8x32xf32>
    %51 = arith.addf %1, %50 : vector<8x32xf32>
    %c0_34 = arith.constant 0 : index
    %c0_35 = arith.constant 0 : index
    %52 = vector.load %arg12[%c0_34, %c0_35] : memref<1x32xf32, #tpu.memory_space<vmem>>, vector<1x32xf32>
    %53 = vector.shape_cast %52 : vector<1x32xf32> to vector<32xf32>
    %c0_36 = arith.constant 0 : index
    %c0_37 = arith.constant 0 : index
    %54 = vector.load %arg13[%c0_36, %c0_37] : memref<1x32xf32, #tpu.memory_space<vmem>>, vector<1x32xf32>
    %55 = vector.shape_cast %54 : vector<1x32xf32> to vector<32xf32>
    %cst_38 = arith.constant dense<0.000000e+00> : vector<8xf32>
    %56 = vector.multi_reduction <add>, %51, %cst_38 [1] : vector<8x32xf32> to vector<8xf32>
    %57 = vector.shape_cast %56 : vector<8xf32> to vector<8x1xf32>
    %58 = arith.mulf %51, %51 : vector<8x32xf32>
    %cst_39 = arith.constant dense<0.000000e+00> : vector<8xf32>
    %59 = vector.multi_reduction <add>, %58, %cst_39 [1] : vector<8x32xf32> to vector<8xf32>
    %60 = vector.shape_cast %59 : vector<8xf32> to vector<8x1xf32>
    %cst_40 = arith.constant 3.125000e-02 : f32
    %61 = vector.broadcast %cst_40 : f32 to vector<8x1xf32>
    %62 = arith.mulf %57, %61 : vector<8x1xf32>
    %63 = arith.mulf %57, %62 : vector<8x1xf32>
    %64 = arith.subf %60, %63 : vector<8x1xf32>
    %cst_41 = arith.constant 0.000000e+00 : f32
    %65 = vector.broadcast %cst_41 : f32 to vector<8x1xf32>
    %66 = arith.maximumf %64, %65 : vector<8x1xf32>
    %cst_42 = arith.constant 0.0322580636 : f32
    %67 = vector.broadcast %cst_42 : f32 to vector<8x1xf32>
    %68 = arith.mulf %66, %67 : vector<8x1xf32>
    %cst_43 = arith.constant 9.99999997E-7 : f32
    %69 = vector.broadcast %cst_43 : f32 to vector<8x1xf32>
    %70 = arith.addf %68, %69 : vector<8x1xf32>
    %71 = math.sqrt %70 : vector<8x1xf32>
    %72 = vector.broadcast %62 : vector<8x1xf32> to vector<8x32xf32>
    %73 = arith.subf %51, %72 : vector<8x32xf32>
    %74 = vector.shape_cast %53 : vector<32xf32> to vector<1x32xf32>
    %75 = vector.broadcast %74 : vector<1x32xf32> to vector<8x32xf32>
    %76 = arith.mulf %75, %73 : vector<8x32xf32>
    %cst_44 = arith.constant 9.99999997E-7 : f32
    %77 = vector.broadcast %cst_44 : f32 to vector<8x1xf32>
    %78 = arith.addf %71, %77 : vector<8x1xf32>
    %79 = vector.broadcast %78 : vector<8x1xf32> to vector<8x32xf32>
    %80 = arith.divf %76, %79 : vector<8x32xf32>
    %81 = vector.shape_cast %55 : vector<32xf32> to vector<1x32xf32>
    %82 = vector.broadcast %81 : vector<1x32xf32> to vector<8x32xf32>
    %83 = arith.addf %80, %82 : vector<8x32xf32>
    %c0_45 = arith.constant 0 : index
    %c0_46 = arith.constant 0 : index
    %84 = vector.load %arg16[%c0_45, %c0_46] : memref<32x128xf32, #tpu.memory_space<vmem>>, vector<32x128xf32>
    %cst_47 = arith.constant dense<0.000000e+00> : vector<8x128xf32>
    %85 = tpu.matmul %83, %84, %cst_47 {dimension_numbers = #tpu.dot_dimension_numbers<[1], [0], [0], [1], [0, 0, 1, 1], [], []>} : vector<8x32xf32>, vector<32x128xf32>, vector<8x128xf32> -> vector<8x128xf32>
    %c0_48 = arith.constant 0 : index
    %c0_49 = arith.constant 0 : index
    %86 = vector.load %arg17[%c0_48, %c0_49] : memref<1x128xf32, #tpu.memory_space<vmem>>, vector<1x128xf32>
    %87 = vector.shape_cast %86 : vector<1x128xf32> to vector<128xf32>
    %88 = vector.shape_cast %87 : vector<128xf32> to vector<1x128xf32>
    %89 = vector.broadcast %88 : vector<1x128xf32> to vector<8x128xf32>
    %90 = arith.addf %85, %89 : vector<8x128xf32>
    %cst_50 = arith.constant 0.000000e+00 : f32
    %91 = vector.broadcast %cst_50 : f32 to vector<8x128xf32>
    %92 = arith.maximumf %90, %91 : vector<8x128xf32>
    %c0_51 = arith.constant 0 : index
    %c0_52 = arith.constant 0 : index
    %93 = vector.load %arg18[%c0_51, %c0_52] : memref<128x32xf32, #tpu.memory_space<vmem>>, vector<128x32xf32>
    %cst_53 = arith.constant dense<0.000000e+00> : vector<8x32xf32>
    %94 = tpu.matmul %92, %93, %cst_53 {dimension_numbers = #tpu.dot_dimension_numbers<[1], [0], [0], [1], [0, 0, 1, 1], [], []>} : vector<8x128xf32>, vector<128x32xf32>, vector<8x32xf32> -> vector<8x32xf32>
    %c0_54 = arith.constant 0 : index
    %c0_55 = arith.constant 0 : index
    %95 = vector.load %arg19[%c0_54, %c0_55] : memref<1x32xf32, #tpu.memory_space<vmem>>, vector<1x32xf32>
    %96 = vector.shape_cast %95 : vector<1x32xf32> to vector<32xf32>
    %97 = vector.shape_cast %96 : vector<32xf32> to vector<1x32xf32>
    %98 = vector.broadcast %97 : vector<1x32xf32> to vector<8x32xf32>
    %99 = arith.addf %94, %98 : vector<8x32xf32>
    %100 = arith.addf %83, %99 : vector<8x32xf32>
    %c0_56 = arith.constant 0 : index
    %c0_57 = arith.constant 0 : index
    %101 = vector.load %arg14[%c0_56, %c0_57] : memref<1x32xf32, #tpu.memory_space<vmem>>, vector<1x32xf32>
    %102 = vector.shape_cast %101 : vector<1x32xf32> to vector<32xf32>
    %c0_58 = arith.constant 0 : index
    %c0_59 = arith.constant 0 : index
    %103 = vector.load %arg15[%c0_58, %c0_59] : memref<1x32xf32, #tpu.memory_space<vmem>>, vector<1x32xf32>
    %104 = vector.shape_cast %103 : vector<1x32xf32> to vector<32xf32>
    %cst_60 = arith.constant dense<0.000000e+00> : vector<8xf32>
    %105 = vector.multi_reduction <add>, %100, %cst_60 [1] : vector<8x32xf32> to vector<8xf32>
    %106 = vector.shape_cast %105 : vector<8xf32> to vector<8x1xf32>
    %107 = arith.mulf %100, %100 : vector<8x32xf32>
    %cst_61 = arith.constant dense<0.000000e+00> : vector<8xf32>
    %108 = vector.multi_reduction <add>, %107, %cst_61 [1] : vector<8x32xf32> to vector<8xf32>
    %109 = vector.shape_cast %108 : vector<8xf32> to vector<8x1xf32>
    %cst_62 = arith.constant 3.125000e-02 : f32
    %110 = vector.broadcast %cst_62 : f32 to vector<8x1xf32>
    %111 = arith.mulf %106, %110 : vector<8x1xf32>
    %112 = arith.mulf %106, %111 : vector<8x1xf32>
    %113 = arith.subf %109, %112 : vector<8x1xf32>
    %cst_63 = arith.constant 0.000000e+00 : f32
    %114 = vector.broadcast %cst_63 : f32 to vector<8x1xf32>
    %115 = arith.maximumf %113, %114 : vector<8x1xf32>
    %cst_64 = arith.constant 0.0322580636 : f32
    %116 = vector.broadcast %cst_64 : f32 to vector<8x1xf32>
    %117 = arith.mulf %115, %116 : vector<8x1xf32>
    %cst_65 = arith.constant 9.99999997E-7 : f32
    %118 = vector.broadcast %cst_65 : f32 to vector<8x1xf32>
    %119 = arith.addf %117, %118 : vector<8x1xf32>
    %120 = math.sqrt %119 : vector<8x1xf32>
    %121 = vector.broadcast %111 : vector<8x1xf32> to vector<8x32xf32>
    %122 = arith.subf %100, %121 : vector<8x32xf32>
    %123 = vector.shape_cast %102 : vector<32xf32> to vector<1x32xf32>
    %124 = vector.broadcast %123 : vector<1x32xf32> to vector<8x32xf32>
    %125 = arith.mulf %124, %122 : vector<8x32xf32>
    %cst_66 = arith.constant 9.99999997E-7 : f32
    %126 = vector.broadcast %cst_66 : f32 to vector<8x1xf32>
    %127 = arith.addf %120, %126 : vector<8x1xf32>
    %128 = vector.broadcast %127 : vector<8x1xf32> to vector<8x32xf32>
    %129 = arith.divf %125, %128 : vector<8x32xf32>
    %130 = vector.shape_cast %104 : vector<32xf32> to vector<1x32xf32>
    %131 = vector.broadcast %130 : vector<1x32xf32> to vector<8x32xf32>
    %132 = arith.addf %129, %131 : vector<8x32xf32>
    %133 = vector.broadcast %7 : vector<8x1xf32> to vector<8x32xf32>
    %134 = arith.mulf %133, %132 : vector<8x32xf32>
    %c0_67 = arith.constant 0 : index
    %c0_68 = arith.constant 0 : index
    %c0_69 = arith.constant 0 : index
    %135 = vector.load %arg20[%c0_67, %c0_68, %c0_69] : memref<1x8x32xf32, #tpu.memory_space<vmem>>, vector<1x8x32xf32>
    %136 = vector.shape_cast %135 : vector<1x8x32xf32> to vector<8x32xf32>
    %137 = vector.shape_cast %134 : vector<8x32xf32> to vector<1x8x32xf32>
    tpu.vector_store %arg20[%c0_67, %c0_68, %c0_69], %137 {strides = array<i32>} : memref<1x8x32xf32, #tpu.memory_space<vmem>>, vector<1x8x32xf32>,
    return
  }
  func.func @transform_0(%arg0: i32, %arg1: i32) -> (i32, i32, i32) {
    %c0_i32 = arith.constant 0 : i32
    %c0_i32_0 = arith.constant 0 : i32
    return %arg0, %arg1, %c0_i32 : i32, i32, i32
  }
  func.func @transform_1(%arg0: i32, %arg1: i32) -> (i32, i32, i32) {
    %c0_i32 = arith.constant 0 : i32
    %c0_i32_0 = arith.constant 0 : i32
    return %arg0, %arg1, %c0_i32 : i32, i32, i32
  }
  func.func @transform_2(%arg0: i32, %arg1: i32) -> (i32, i32, i32) {
    %c0_i32 = arith.constant 0 : i32
    %c0_i32_0 = arith.constant 0 : i32
    return %arg0, %arg1, %c0_i32 : i32, i32, i32
  }
  func.func @transform_3(%arg0: i32, %arg1: i32) -> (i32, i32, i32) {
    %c0_i32 = arith.constant 0 : i32
    %c0_i32_0 = arith.constant 0 : i32
    return %arg0, %arg1, %c0_i32 : i32, i32, i32
  }
  func.func @transform_4(%arg0: i32, %arg1: i32) -> (i32, i32) {
    %c0_i32 = arith.constant 0 : i32
    %c0_i32_0 = arith.constant 0 : i32
    %c0_i32_1 = arith.constant 0 : i32
    return %c0_i32, %c0_i32_0 : i32, i32
  }
  func.func @transform_5(%arg0: i32, %arg1: i32) -> (i32, i32) {
    %c0_i32 = arith.constant 0 : i32
    %c0_i32_0 = arith.constant 0 : i32
    %c0_i32_1 = arith.constant 0 : i32
    return %c0_i32, %c0_i32_0 : i32, i32
  }
  func.func @transform_6(%arg0: i32, %arg1: i32) -> (i32, i32) {
    %c0_i32 = arith.constant 0 : i32
    %c0_i32_0 = arith.constant 0 : i32
    %c0_i32_1 = arith.constant 0 : i32
    return %c0_i32, %c0_i32_0 : i32, i32
  }
  func.func @transform_7(%arg0: i32, %arg1: i32) -> (i32, i32) {
    %c0_i32 = arith.constant 0 : i32
    %c0_i32_0 = arith.constant 0 : i32
    %c0_i32_1 = arith.constant 0 : i32
    return %c0_i32, %c0_i32_0 : i32, i32
  }
  func.func @transform_8(%arg0: i32, %arg1: i32) -> (i32, i32) {
    %c0_i32 = arith.constant 0 : i32
    %c0_i32_0 = arith.constant 0 : i32
    %c0_i32_1 = arith.constant 0 : i32
    return %c0_i32, %c0_i32_0 : i32, i32
  }
  func.func @transform_9(%arg0: i32, %arg1: i32) -> (i32, i32) {
    %c0_i32 = arith.constant 0 : i32
    %c0_i32_0 = arith.constant 0 : i32
    %c0_i32_1 = arith.constant 0 : i32
    return %c0_i32, %c0_i32_0 : i32, i32
  }
  func.func @transform_10(%arg0: i32, %arg1: i32) -> (i32, i32) {
    %c0_i32 = arith.constant 0 : i32
    %c0_i32_0 = arith.constant 0 : i32
    %c0_i32_1 = arith.constant 0 : i32
    return %c0_i32, %c0_i32_0 : i32, i32
  }
  func.func @transform_11(%arg0: i32, %arg1: i32) -> (i32, i32) {
    %c0_i32 = arith.constant 0 : i32
    %c0_i32_0 = arith.constant 0 : i32
    %c0_i32_1 = arith.constant 0 : i32
    return %c0_i32, %c0_i32_0 : i32, i32
  }
  func.func @transform_12(%arg0: i32, %arg1: i32) -> (i32, i32) {
    %c0_i32 = arith.constant 0 : i32
    %c0_i32_0 = arith.constant 0 : i32
    %c0_i32_1 = arith.constant 0 : i32
    return %c0_i32, %c0_i32_0 : i32, i32
  }
  func.func @transform_13(%arg0: i32, %arg1: i32) -> (i32, i32) {
    %c0_i32 = arith.constant 0 : i32
    %c0_i32_0 = arith.constant 0 : i32
    %c0_i32_1 = arith.constant 0 : i32
    return %c0_i32, %c0_i32_0 : i32, i32
  }
  func.func @transform_14(%arg0: i32, %arg1: i32) -> (i32, i32) {
    %c0_i32 = arith.constant 0 : i32
    %c0_i32_0 = arith.constant 0 : i32
    %c0_i32_1 = arith.constant 0 : i32
    return %c0_i32, %c0_i32_0 : i32, i32
  }
  func.func @transform_15(%arg0: i32, %arg1: i32) -> (i32, i32) {
    %c0_i32 = arith.constant 0 : i32
    %c0_i32_0 = arith.constant 0 : i32
    %c0_i32_1 = arith.constant 0 : i32
    return %c0_i32, %c0_i32_0 : i32, i32
  }
  func.func @transform_16(%arg0: i32, %arg1: i32) -> (i32, i32) {
    %c0_i32 = arith.constant 0 : i32
    %c0_i32_0 = arith.constant 0 : i32
    %c0_i32_1 = arith.constant 0 : i32
    return %c0_i32, %c0_i32_0 : i32, i32
  }
  func.func @transform_17(%arg0: i32, %arg1: i32) -> (i32, i32) {
    %c0_i32 = arith.constant 0 : i32
    %c0_i32_0 = arith.constant 0 : i32
    %c0_i32_1 = arith.constant 0 : i32
    return %c0_i32, %c0_i32_0 : i32, i32
  }
  func.func @transform_18(%arg0: i32, %arg1: i32) -> (i32, i32, i32) {
    %c0_i32 = arith.constant 0 : i32
    %c0_i32_0 = arith.constant 0 : i32
    return %arg0, %arg1, %c0_i32 : i32, i32, i32
  }
}

</mosaic_0001>

<llo_original>
// kernel: tpu_custom_call.1
$region0: #{tpu_custom_call.1}
  #allocation0 [shape = 'u32[]', space=smem, size = 0x4, offset = 0x4, fixed_abs, tag = 'smem constant byte address 0x4 - core index']
  #allocation1 [shape = 'u32[144,128]{1,0:T(1,128)}', space=vmem, size = 0x12000, scoped, tag = 'internal scratch']
  %s0 = inlined_call_operand.vmem [shape: f32[2,8,32], index: 0, kind: input, shape index: {}]
  %s1 = inlined_call_operand.vmem [shape: f32[2,64,32], index: 1, kind: input, shape index: {}]
  %s2 = inlined_call_operand.vmem [shape: f32[2,8,8], index: 2, kind: input, shape index: {}]
  %s3 = inlined_call_operand.vmem [shape: f32[2,8,1], index: 3, kind: input, shape index: {}]
  %s4 = inlined_call_operand.vmem [shape: f32[32,4], index: 4, kind: input, shape index: {}]
  %s5 = inlined_call_operand.vmem [shape: f32[4,32], index: 5, kind: input, shape index: {}]
  %s6 = inlined_call_operand.vmem [shape: f32[32,32], index: 6, kind: input, shape index: {}]
  %s7 = inlined_call_operand.vmem [shape: f32[32,32], index: 7, kind: input, shape index: {}]
  %s8 = inlined_call_operand.vmem [shape: f32[32,32], index: 8, kind: input, shape index: {}]
  %s9 = inlined_call_operand.vmem [shape: f32[32,32], index: 9, kind: input, shape index: {}]
  %s10 = inlined_call_operand.vmem [shape: f32[1,32], index: 10, kind: input, shape index: {}]
  %s11 = inlined_call_operand.vmem [shape: f32[1,32], index: 11, kind: input, shape index: {}]
  %s12 = inlined_call_operand.vmem [shape: f32[1,32], index: 12, kind: input, shape index: {}]
  %s13 = inlined_call_operand.vmem [shape: f32[1,32], index: 13, kind: input, shape index: {}]
  %s14 = inlined_call_operand.vmem [shape: f32[32,128], index: 14, kind: input, shape index: {}]
  %s15 = inlined_call_operand.vmem [shape: f32[1,128], index: 15, kind: input, shape index: {}]
  %s16 = inlined_call_operand.vmem [shape: f32[128,32], index: 16, kind: input, shape index: {}]
  %s17 = inlined_call_operand.vmem [shape: f32[1,32], index: 17, kind: input, shape index: {}]
  %s18 = inlined_call_operand.hbm [shape: f32[2,8,32], index: 18, kind: output, shape index: {}]
  %s19 = sld [smem:[#allocation0]]
  $region105: #{tpu_custom_call.1} parent=0
    _
  %s21 = ssub.s32 1, %s19
  %s22 = scalar_select 0, %s21, %s19
  $region1: #{tpu_custom_call.1} parent=0
    #allocation2 [shape = 'u8[8192]{0}', space=vmem, size = 0x2000, scoped, tag = 'output window, operand 0']
    #allocation3 [shape = 's32[2]{0}', space=sflag, size = 0x8, scoped, tag = 'scoped memory for tpu_custom_call.1']
    %23 = vsyncpa [#allocation3], 0
    %s24 = scalar_lea.sflag [#allocation3], 1
    %25 = vsyncpa %s24, 0
    loop: start=0, step=1, limit=4
    $region2: #{tpu_custom_call.1} parent=1 // loop_pre_header
      _
    $region3: #{tpu_custom_call.1} parent=1 // loop_header
      %s27 = sphi 0, %s31
      %p28 = scmp.ge.s32.totalorder %s27, 4
      %s34 = sphi 0, %s46
      %s35 = sphi 0, %s42
      %s36 = sphi 0, %s34
      %s37 = sphi 0, %s35
      %s38 = sphi 0, %s36
      %s39 = sphi 0, %s37
      %s51 = sphi 0, %s53
      %s54 = sphi 0, %s51
      %s55 = sphi 0, %s54
      %s71 = sphi 0, %s55
      %s79 = sphi 0, %s81
      %s82 = sphi 0, %s79
      %s83 = sphi 0, %s82
      %s99 = sphi 0, %s83
      %s107 = sphi 0, %s109
      %s110 = sphi 0, %s107
      %s111 = sphi 0, %s110
      %s127 = sphi 0, %s111
      %s135 = sphi 0, %s137
      %s138 = sphi 0, %s135
      %s139 = sphi 0, %s138
      %s155 = sphi 0, %s139
      %s159 = sphi 0, %s159
      %s161 = sphi 0, %s159
      %s162 = sphi 0, %s161
      %s176 = sphi 0, %s162
      %s180 = sphi 0, %s180
      %s182 = sphi 0, %s180
      %s183 = sphi 0, %s182
      %s197 = sphi 0, %s183
      %s201 = sphi 0, %s201
      %s203 = sphi 0, %s201
      %s204 = sphi 0, %s203
      %s218 = sphi 0, %s204
      %s222 = sphi 0, %s222
      %s224 = sphi 0, %s222
      %s225 = sphi 0, %s224
      %s239 = sphi 0, %s225
      %s243 = sphi 0, %s243
      %s245 = sphi 0, %s243
      %s246 = sphi 0, %s245
      %s260 = sphi 0, %s246
      %s264 = sphi 0, %s264
      %s266 = sphi 0, %s264
      %s267 = sphi 0, %s266
      %s281 = sphi 0, %s267
      %s285 = sphi 0, %s285
      %s287 = sphi 0, %s285
      %s288 = sphi 0, %s287
      %s302 = sphi 0, %s288
      %s306 = sphi 0, %s306
      %s308 = sphi 0, %s306
      %s309 = sphi 0, %s308
      %s323 = sphi 0, %s309
      %s327 = sphi 0, %s327
      %s329 = sphi 0, %s327
      %s330 = sphi 0, %s329
      %s344 = sphi 0, %s330
      %s348 = sphi 0, %s348
      %s350 = sphi 0, %s348
      %s351 = sphi 0, %s350
      %s365 = sphi 0, %s351
      %s369 = sphi 0, %s369
      %s371 = sphi 0, %s369
      %s372 = sphi 0, %s371
      %s386 = sphi 0, %s372
      %s390 = sphi 0, %s390
      %s392 = sphi 0, %s390
      %s393 = sphi 0, %s392
      %s407 = sphi 0, %s393
      %s411 = sphi 0, %s411
      %s413 = sphi 0, %s411
      %s414 = sphi 0, %s413
      %s428 = sphi 0, %s414
      %s432 = sphi 0, %s432
      %s434 = sphi 0, %s432
      %s435 = sphi 0, %s434
      %s449 = sphi 0, %s435
      %s457 = sphi 0, %s459
      %s460 = sphi 0, %s457
      %s461 = sphi 0, %s460
      %s477 = sphi 0, %s461
    $region4: #{tpu_custom_call.1} parent=1 // loop_header_branch
      %30 = sbr.rel (%p28) target = $region8
    $region5: #{tpu_custom_call.1} parent=1 // loop_body
      %s32 = ssub.s32 %s27, 1
      %s33 = ssub.s32 %s27, 2
      %s40 = sadd.s32 1, %s35
      %p41 = scmp.ge.s32.totalorder %s40, 1
      %s42 = scalar_select %p41, 0, %s40
      %s43 = sadd.s32 1, %s34
      %s44 = scalar_select %p41, %s43, %s34
      %p45 = scmp.ge.s32.totalorder %s44, 2
      %s46 = scalar_select %p45, 0, %s44
      %s47 = ssub.s32 %s34, %s46
      %s48 = ssub.s32 %s35, %s42
      %s49 = sor.u32 %s47, %s48
      %p50 = scmp.eq.s32.totalorder %s49, 0
      %s52 = sadd.s32 %s51, 1
      %s53 = scalar_select %p50, %s51, %s52
      %p56 = pneg %p50
      %p57 = scmp.eq.s32.totalorder %s27, 1
      %p58 = por %p56, %p57
      %p59 = scmp.ne.s32.totalorder %s51, %s54
      %p60 = scmp.eq.s32.totalorder %s27, 0
      %p61 = por %p59, %p60
      %p62 = scmp.ne.s32.totalorder %s51, %s54
      %p63 = scmp.eq.s32.totalorder %s32, 1
      %p64 = por %p62, %p63
      %p65 = scmp.ne.s32.totalorder %s54, %s55
      %p66 = scmp.eq.s32.totalorder %s32, 0
      %p67 = por %p65, %p66
      %p68 = scmp.ne.s32.totalorder %s54, %s55
      %p69 = scmp.eq.s32.totalorder %s33, 1
      %p70 = por %p68, %p69
      %p72 = scmp.ne.s32.totalorder %s55, %s71
      %p73 = scmp.eq.s32.totalorder %s33, 0
      %p74 = por %p72, %p73
      %s75 = ssub.s32 %s34, %s46
      %s76 = ssub.s32 %s35, %s42
      %s77 = sor.u32 %s75, %s76
      %p78 = scmp.eq.s32.totalorder %s77, 0
      %s80 = sadd.s32 %s79, 1
      %s81 = scalar_select %p78, %s79, %s80
      %p84 = pneg %p78
      %p85 = scmp.eq.s32.totalorder %s27, 1
      %p86 = por %p84, %p85
      %p87 = scmp.ne.s32.totalorder %s79, %s82
      %p88 = scmp.eq.s32.totalorder %s27, 0
      %p89 = por %p87, %p88
      %p90 = scmp.ne.s32.totalorder %s79, %s82
      %p91 = scmp.eq.s32.totalorder %s32, 1
      %p92 = por %p90, %p91
      %p93 = scmp.ne.s32.totalorder %s82, %s83
      %p94 = scmp.eq.s32.totalorder %s32, 0
      %p95 = por %p93, %p94
      %p96 = scmp.ne.s32.totalorder %s82, %s83
      %p97 = scmp.eq.s32.totalorder %s33, 1
      %p98 = por %p96, %p97
      %p100 = scmp.ne.s32.totalorder %s83, %s99
      %p101 = scmp.eq.s32.totalorder %s33, 0
      %p102 = por %p100, %p101
      %s103 = ssub.s32 %s34, %s46
      %s104 = ssub.s32 %s35, %s42
      %s105 = sor.u32 %s103, %s104
      %p106 = scmp.eq.s32.totalorder %s105, 0
      %s108 = sadd.s32 %s107, 1
      %s109 = scalar_select %p106, %s107, %s108
      %p112 = pneg %p106
      %p113 = scmp.eq.s32.totalorder %s27, 1
      %p114 = por %p112, %p113
      %p115 = scmp.ne.s32.totalorder %s107, %s110
      %p116 = scmp.eq.s32.totalorder %s27, 0
      %p117 = por %p115, %p116
      %p118 = scmp.ne.s32.totalorder %s107, %s110
      %p119 = scmp.eq.s32.totalorder %s32, 1
      %p120 = por %p118, %p119
      %p121 = scmp.ne.s32.totalorder %s110, %s111
      %p122 = scmp.eq.s32.totalorder %s32, 0
      %p123 = por %p121, %p122
      %p124 = scmp.ne.s32.totalorder %s110, %s111
      %p125 = scmp.eq.s32.totalorder %s33, 1
      %p126 = por %p124, %p125
      %p128 = scmp.ne.s32.totalorder %s111, %s127
      %p129 = scmp.eq.s32.totalorder %s33, 0
      %p130 = por %p128, %p129
      %s131 = ssub.s32 %s34, %s46
      %s132 = ssub.s32 %s35, %s42
      %s133 = sor.u32 %s131, %s132
      %p134 = scmp.eq.s32.totalorder %s133, 0
      %s136 = sadd.s32 %s135, 1
      %s137 = scalar_select %p134, %s135, %s136
      %p140 = pneg %p134
      %p141 = scmp.eq.s32.totalorder %s27, 1
      %p142 = por %p140, %p141
      %p143 = scmp.ne.s32.totalorder %s135, %s138
      %p144 = scmp.eq.s32.totalorder %s27, 0
      %p145 = por %p143, %p144
      %p146 = scmp.ne.s32.totalorder %s135, %s138
      %p147 = scmp.eq.s32.totalorder %s32, 1
      %p148 = por %p146, %p147
      %p149 = scmp.ne.s32.totalorder %s138, %s139
      %p150 = scmp.eq.s32.totalorder %s32, 0
      %p151 = por %p149, %p150
      %p152 = scmp.ne.s32.totalorder %s138, %s139
      %p153 = scmp.eq.s32.totalorder %s33, 1
      %p154 = por %p152, %p153
      %p156 = scmp.ne.s32.totalorder %s139, %s155
      %p157 = scmp.eq.s32.totalorder %s33, 0
      %p158 = por %p156, %p157
      %s160 = sadd.s32 %s159, 1
      %p163 = scmp.eq.s32.totalorder %s27, 1
      %p164 = scmp.ne.s32.totalorder %s159, %s161
      %p165 = scmp.eq.s32.totalorder %s27, 0
      %p166 = por %p164, %p165
      %p167 = scmp.ne.s32.totalorder %s159, %s161
      %p168 = scmp.eq.s32.totalorder %s32, 1
      %p169 = por %p167, %p168
      %p170 = scmp.ne.s32.totalorder %s161, %s162
      %p171 = scmp.eq.s32.totalorder %s32, 0
      %p172 = por %p170, %p171
      %p173 = scmp.ne.s32.totalorder %s161, %s162
      %p174 = scmp.eq.s32.totalorder %s33, 1
      %p175 = por %p173, %p174
      %p177 = scmp.ne.s32.totalorder %s162, %s176
      %p178 = scmp.eq.s32.totalorder %s33, 0
      %p179 = por %p177, %p178
      %s181 = sadd.s32 %s180, 1
      %p184 = scmp.eq.s32.totalorder %s27, 1
      %p185 = scmp.ne.s32.totalorder %s180, %s182
      %p186 = scmp.eq.s32.totalorder %s27, 0
      %p187 = por %p185, %p186
      %p188 = scmp.ne.s32.totalorder %s180, %s182
      %p189 = scmp.eq.s32.totalorder %s32, 1
      %p190 = por %p188, %p189
      %p191 = scmp.ne.s32.totalorder %s182, %s183
      %p192 = scmp.eq.s32.totalorder %s32, 0
      %p193 = por %p191, %p192
      %p194 = scmp.ne.s32.totalorder %s182, %s183
      %p195 = scmp.eq.s32.totalorder %s33, 1
      %p196 = por %p194, %p195
      %p198 = scmp.ne.s32.totalorder %s183, %s197
      %p199 = scmp.eq.s32.totalorder %s33, 0
      %p200 = por %p198, %p199
      %s202 = sadd.s32 %s201, 1
      %p205 = scmp.eq.s32.totalorder %s27, 1
      %p206 = scmp.ne.s32.totalorder %s201, %s203
      %p207 = scmp.eq.s32.totalorder %s27, 0
      %p208 = por %p206, %p207
      %p209 = scmp.ne.s32.totalorder %s201, %s203
      %p210 = scmp.eq.s32.totalorder %s32, 1
      %p211 = por %p209, %p210
      %p212 = scmp.ne.s32.totalorder %s203, %s204
      %p213 = scmp.eq.s32.totalorder %s32, 0
      %p214 = por %p212, %p213
      %p215 = scmp.ne.s32.totalorder %s203, %s204
      %p216 = scmp.eq.s32.totalorder %s33, 1
      %p217 = por %p215, %p216
      %p219 = scmp.ne.s32.totalorder %s204, %s218
      %p220 = scmp.eq.s32.totalorder %s33, 0
      %p221 = por %p219, %p220
      %s223 = sadd.s32 %s222, 1
      %p226 = scmp.eq.s32.totalorder %s27, 1
      %p227 = scmp.ne.s32.totalorder %s222, %s224
      %p228 = scmp.eq.s32.totalorder %s27, 0
      %p229 = por %p227, %p228
      %p230 = scmp.ne.s32.totalorder %s222, %s224
      %p231 = scmp.eq.s32.totalorder %s32, 1
      %p232 = por %p230, %p231
      %p233 = scmp.ne.s32.totalorder %s224, %s225
      %p234 = scmp.eq.s32.totalorder %s32, 0
      %p235 = por %p233, %p234
      %p236 = scmp.ne.s32.totalorder %s224, %s225
      %p237 = scmp.eq.s32.totalorder %s33, 1
      %p238 = por %p236, %p237
      %p240 = scmp.ne.s32.totalorder %s225, %s239
      %p241 = scmp.eq.s32.totalorder %s33, 0
      %p242 = por %p240, %p241
      %s244 = sadd.s32 %s243, 1
      %p247 = scmp.eq.s32.totalorder %s27, 1
      %p248 = scmp.ne.s32.totalorder %s243, %s245
      %p249 = scmp.eq.s32.totalorder %s27, 0
      %p250 = por %p248, %p249
      %p251 = scmp.ne.s32.totalorder %s243, %s245
      %p252 = scmp.eq.s32.totalorder %s32, 1
      %p253 = por %p251, %p252
      %p254 = scmp.ne.s32.totalorder %s245, %s246
      %p255 = scmp.eq.s32.totalorder %s32, 0
      %p256 = por %p254, %p255
      %p257 = scmp.ne.s32.totalorder %s245, %s246
      %p258 = scmp.eq.s32.totalorder %s33, 1
      %p259 = por %p257, %p258
      %p261 = scmp.ne.s32.totalorder %s246, %s260
      %p262 = scmp.eq.s32.totalorder %s33, 0
      %p263 = por %p261, %p262
      %s265 = sadd.s32 %s264, 1
      %p268 = scmp.eq.s32.totalorder %s27, 1
      %p269 = scmp.ne.s32.totalorder %s264, %s266
      %p270 = scmp.eq.s32.totalorder %s27, 0
      %p271 = por %p269, %p270
      %p272 = scmp.ne.s32.totalorder %s264, %s266
      %p273 = scmp.eq.s32.totalorder %s32, 1
      %p274 = por %p272, %p273
      %p275 = scmp.ne.s32.totalorder %s266, %s267
      %p276 = scmp.eq.s32.totalorder %s32, 0
      %p277 = por %p275, %p276
      %p278 = scmp.ne.s32.totalorder %s266, %s267
      %p279 = scmp.eq.s32.totalorder %s33, 1
      %p280 = por %p278, %p279
      %p282 = scmp.ne.s32.totalorder %s267, %s281
      %p283 = scmp.eq.s32.totalorder %s33, 0
      %p284 = por %p282, %p283
      %s286 = sadd.s32 %s285, 1
      %p289 = scmp.eq.s32.totalorder %s27, 1
      %p290 = scmp.ne.s32.totalorder %s285, %s287
      %p291 = scmp.eq.s32.totalorder %s27, 0
      %p292 = por %p290, %p291
      %p293 = scmp.ne.s32.totalorder %s285, %s287
      %p294 = scmp.eq.s32.totalorder %s32, 1
      %p295 = por %p293, %p294
      %p296 = scmp.ne.s32.totalorder %s287, %s288
      %p297 = scmp.eq.s32.totalorder %s32, 0
      %p298 = por %p296, %p297
      %p299 = scmp.ne.s32.totalorder %s287, %s288
      %p300 = scmp.eq.s32.totalorder %s33, 1
      %p301 = por %p299, %p300
      %p303 = scmp.ne.s32.totalorder %s288, %s302
      %p304 = scmp.eq.s32.totalorder %s33, 0
      %p305 = por %p303, %p304
      %s307 = sadd.s32 %s306, 1
      %p310 = scmp.eq.s32.totalorder %s27, 1
      %p311 = scmp.ne.s32.totalorder %s306, %s308
      %p312 = scmp.eq.s32.totalorder %s27, 0
      %p313 = por %p311, %p312
      %p314 = scmp.ne.s32.totalorder %s306, %s308
      %p315 = scmp.eq.s32.totalorder %s32, 1
      %p316 = por %p314, %p315
      %p317 = scmp.ne.s32.totalorder %s308, %s309
      %p318 = scmp.eq.s32.totalorder %s32, 0
      %p319 = por %p317, %p318
      %p320 = scmp.ne.s32.totalorder %s308, %s309
      %p321 = scmp.eq.s32.totalorder %s33, 1
      %p322 = por %p320, %p321
      %p324 = scmp.ne.s32.totalorder %s309, %s323
      %p325 = scmp.eq.s32.totalorder %s33, 0
      %p326 = por %p324, %p325
      %s328 = sadd.s32 %s327, 1
      %p331 = scmp.eq.s32.totalorder %s27, 1
      %p332 = scmp.ne.s32.totalorder %s327, %s329
      %p333 = scmp.eq.s32.totalorder %s27, 0
      %p334 = por %p332, %p333
      %p335 = scmp.ne.s32.totalorder %s327, %s329
      %p336 = scmp.eq.s32.totalorder %s32, 1
      %p337 = por %p335, %p336
      %p338 = scmp.ne.s32.totalorder %s329, %s330
      %p339 = scmp.eq.s32.totalorder %s32, 0
      %p340 = por %p338, %p339
      %p341 = scmp.ne.s32.totalorder %s329, %s330
      %p342 = scmp.eq.s32.totalorder %s33, 1
      %p343 = por %p341, %p342
      %p345 = scmp.ne.s32.totalorder %s330, %s344
      %p346 = scmp.eq.s32.totalorder %s33, 0
      %p347 = por %p345, %p346
      %s349 = sadd.s32 %s348, 1
      %p352 = scmp.eq.s32.totalorder %s27, 1
      %p353 = scmp.ne.s32.totalorder %s348, %s350
      %p354 = scmp.eq.s32.totalorder %s27, 0
      %p355 = por %p353, %p354
      %p356 = scmp.ne.s32.totalorder %s348, %s350
      %p357 = scmp.eq.s32.totalorder %s32, 1
      %p358 = por %p356, %p357
      %p359 = scmp.ne.s32.totalorder %s350, %s351
      %p360 = scmp.eq.s32.totalorder %s32, 0
      %p361 = por %p359, %p360
      %p362 = scmp.ne.s32.totalorder %s350, %s351
      %p363 = scmp.eq.s32.totalorder %s33, 1
      %p364 = por %p362, %p363
      %p366 = scmp.ne.s32.totalorder %s351, %s365
      %p367 = scmp.eq.s32.totalorder %s33, 0
      %p368 = por %p366, %p367
      %s370 = sadd.s32 %s369, 1
      %p373 = scmp.eq.s32.totalorder %s27, 1
      %p374 = scmp.ne.s32.totalorder %s369, %s371
      %p375 = scmp.eq.s32.totalorder %s27, 0
      %p376 = por %p374, %p375
      %p377 = scmp.ne.s32.totalorder %s369, %s371
      %p378 = scmp.eq.s32.totalorder %s32, 1
      %p379 = por %p377, %p378
      %p380 = scmp.ne.s32.totalorder %s371, %s372
      %p381 = scmp.eq.s32.totalorder %s32, 0
      %p382 = por %p380, %p381
      %p383 = scmp.ne.s32.totalorder %s371, %s372
      %p384 = scmp.eq.s32.totalorder %s33, 1
      %p385 = por %p383, %p384
      %p387 = scmp.ne.s32.totalorder %s372, %s386
      %p388 = scmp.eq.s32.totalorder %s33, 0
      %p389 = por %p387, %p388
      %s391 = sadd.s32 %s390, 1
      %p394 = scmp.eq.s32.totalorder %s27, 1
      %p395 = scmp.ne.s32.totalorder %s390, %s392
      %p396 = scmp.eq.s32.totalorder %s27, 0
      %p397 = por %p395, %p396
      %p398 = scmp.ne.s32.totalorder %s390, %s392
      %p399 = scmp.eq.s32.totalorder %s32, 1
      %p400 = por %p398, %p399
      %p401 = scmp.ne.s32.totalorder %s392, %s393
      %p402 = scmp.eq.s32.totalorder %s32, 0
      %p403 = por %p401, %p402
      %p404 = scmp.ne.s32.totalorder %s392, %s393
      %p405 = scmp.eq.s32.totalorder %s33, 1
      %p406 = por %p404, %p405
      %p408 = scmp.ne.s32.totalorder %s393, %s407
      %p409 = scmp.eq.s32.totalorder %s33, 0
      %p410 = por %p408, %p409
      %s412 = sadd.s32 %s411, 1
      %p415 = scmp.eq.s32.totalorder %s27, 1
      %p416 = scmp.ne.s32.totalorder %s411, %s413
      %p417 = scmp.eq.s32.totalorder %s27, 0
      %p418 = por %p416, %p417
      %p419 = scmp.ne.s32.totalorder %s411, %s413
      %p420 = scmp.eq.s32.totalorder %s32, 1
      %p421 = por %p419, %p420
      %p422 = scmp.ne.s32.totalorder %s413, %s414
      %p423 = scmp.eq.s32.totalorder %s32, 0
      %p424 = por %p422, %p423
      %p425 = scmp.ne.s32.totalorder %s413, %s414
      %p426 = scmp.eq.s32.totalorder %s33, 1
      %p427 = por %p425, %p426
      %p429 = scmp.ne.s32.totalorder %s414, %s428
      %p430 = scmp.eq.s32.totalorder %s33, 0
      %p431 = por %p429, %p430
      %s433 = sadd.s32 %s432, 1
      %p436 = scmp.eq.s32.totalorder %s27, 1
      %p437 = scmp.ne.s32.totalorder %s432, %s434
      %p438 = scmp.eq.s32.totalorder %s27, 0
      %p439 = por %p437, %p438
      %p440 = scmp.ne.s32.totalorder %s432, %s434
      %p441 = scmp.eq.s32.totalorder %s32, 1
      %p442 = por %p440, %p441
      %p443 = scmp.ne.s32.totalorder %s434, %s435
      %p444 = scmp.eq.s32.totalorder %s32, 0
      %p445 = por %p443, %p444
      %p446 = scmp.ne.s32.totalorder %s434, %s435
      %p447 = scmp.eq.s32.totalorder %s33, 1
      %p448 = por %p446, %p447
      %p450 = scmp.ne.s32.totalorder %s435, %s449
      %p451 = scmp.eq.s32.totalorder %s33, 0
      %p452 = por %p450, %p451
      %s453 = ssub.s32 %s34, %s46
      %s454 = ssub.s32 %s35, %s42
      %s455 = sor.u32 %s453, %s454
      %p456 = scmp.eq.s32.totalorder %s455, 0
      %s458 = sadd.s32 %s457, 1
      %s459 = scalar_select %p456, %s457, %s458
      %p462 = pneg %p456
      %p463 = scmp.eq.s32.totalorder %s27, 1
      %p464 = por %p462, %p463
      %p465 = scmp.ne.s32.totalorder %s457, %s460
      %p466 = scmp.eq.s32.totalorder %s27, 0
      %p467 = por %p465, %p466
      %p468 = scmp.ne.s32.totalorder %s457, %s460
      %p469 = scmp.eq.s32.totalorder %s32, 1
      %p470 = por %p468, %p469
      %p471 = scmp.ne.s32.totalorder %s460, %s461
      %p472 = scmp.eq.s32.totalorder %s32, 0
      %p473 = por %p471, %p472
      %p474 = scmp.ne.s32.totalorder %s460, %s461
      %p475 = scmp.eq.s32.totalorder %s33, 1
      %p476 = por %p474, %p475
      %p478 = scmp.ne.s32.totalorder %s461, %s477
      %p479 = scmp.eq.s32.totalorder %s33, 0
      %p480 = por %p478, %p479
      %p481 = scmp.le.s32.totalorder 1, %s27
      %p482 = scmp.lt.s32.totalorder %s27, 3
      %p483 = pnand %p481, %p482
      %p484 = pneg %p483
      // Predicated region
      $region9: #{tpu_custom_call.1} parent=5 // pred_check
        _
      $region10: #{tpu_custom_call.1} parent=5 // pred_check_branch
        %486 = sbr.rel (%p483) target = $region12
      $region11: #{tpu_custom_call.1} parent=5 // pred_region
        %s487 = ssub.s32 %s27, 1
        // Predicated region
        $region13: #{tpu_custom_call.1} parent=11 // pred_check
          %p488 = pneg %p172
        $region14: #{tpu_custom_call.1} parent=11 // pred_check_branch
          %490 = sbr.rel (%p488) target = $region16
        $region15: #{tpu_custom_call.1} parent=11 // pred_region
          _
        $region16: #{tpu_custom_call.1} parent=11 // pred_fallthru
          _
        // Predicated region
        $region17: #{tpu_custom_call.1} parent=11 // pred_check
          %p491 = pneg %p193
        $region18: #{tpu_custom_call.1} parent=11 // pred_check_branch
          %493 = sbr.rel (%p491) target = $region20
        $region19: #{tpu_custom_call.1} parent=11 // pred_region
          _
        $region20: #{tpu_custom_call.1} parent=11 // pred_fallthru
          _
        // Predicated region
        $region21: #{tpu_custom_call.1} parent=11 // pred_check
          %p494 = pneg %p214
        $region22: #{tpu_custom_call.1} parent=11 // pred_check_branch
          %496 = sbr.rel (%p494) target = $region24
        $region23: #{tpu_custom_call.1} parent=11 // pred_region
          _
        $region24: #{tpu_custom_call.1} parent=11 // pred_fallthru
          _
        // Predicated region
        $region25: #{tpu_custom_call.1} parent=11 // pred_check
          %p497 = pneg %p235
        $region26: #{tpu_custom_call.1} parent=11 // pred_check_branch
          %499 = sbr.rel (%p497) target = $region28
        $region27: #{tpu_custom_call.1} parent=11 // pred_region
          _
        $region28: #{tpu_custom_call.1} parent=11 // pred_fallthru
          _
        // Predicated region
        $region29: #{tpu_custom_call.1} parent=11 // pred_check
          %p500 = pneg %p256
        $region30: #{tpu_custom_call.1} parent=11 // pred_check_branch
          %502 = sbr.rel (%p500) target = $region32
        $region31: #{tpu_custom_call.1} parent=11 // pred_region
          _
        $region32: #{tpu_custom_call.1} parent=11 // pred_fallthru
          _
        // Predicated region
        $region33: #{tpu_custom_call.1} parent=11 // pred_check
          %p503 = pneg %p277
        $region34: #{tpu_custom_call.1} parent=11 // pred_check_branch
          %505 = sbr.rel (%p503) target = $region36
        $region35: #{tpu_custom_call.1} parent=11 // pred_region
          _
        $region36: #{tpu_custom_call.1} parent=11 // pred_fallthru
          _
        // Predicated region
        $region37: #{tpu_custom_call.1} parent=11 // pred_check
          %p506 = pneg %p298
        $region38: #{tpu_custom_call.1} parent=11 // pred_check_branch
          %508 = sbr.rel (%p506) target = $region40
        $region39: #{tpu_custom_call.1} parent=11 // pred_region
          _
        $region40: #{tpu_custom_call.1} parent=11 // pred_fallthru
          _
        // Predicated region
        $region41: #{tpu_custom_call.1} parent=11 // pred_check
          %p509 = pneg %p319
        $region42: #{tpu_custom_call.1} parent=11 // pred_check_branch
          %511 = sbr.rel (%p509) target = $region44
        $region43: #{tpu_custom_call.1} parent=11 // pred_region
          _
        $region44: #{tpu_custom_call.1} parent=11 // pred_fallthru
          _
        // Predicated region
        $region45: #{tpu_custom_call.1} parent=11 // pred_check
          %p512 = pneg %p340
        $region46: #{tpu_custom_call.1} parent=11 // pred_check_branch
          %514 = sbr.rel (%p512) target = $region48
        $region47: #{tpu_custom_call.1} parent=11 // pred_region
          _
        $region48: #{tpu_custom_call.1} parent=11 // pred_fallthru
          _
        // Predicated region
        $region49: #{tpu_custom_call.1} parent=11 // pred_check
          %p515 = pneg %p361
        $region50: #{tpu_custom_call.1} parent=11 // pred_check_branch
          %517 = sbr.rel (%p515) target = $region52
        $region51: #{tpu_custom_call.1} parent=11 // pred_region
          _
        $region52: #{tpu_custom_call.1} parent=11 // pred_fallthru
          _
        // Predicated region
        $region53: #{tpu_custom_call.1} parent=11 // pred_check
          %p518 = pneg %p382
        $region54: #{tpu_custom_call.1} parent=11 // pred_check_branch
          %520 = sbr.rel (%p518) target = $region56
        $region55: #{tpu_custom_call.1} parent=11 // pred_region
          _
        $region56: #{tpu_custom_call.1} parent=11 // pred_fallthru
          _
        // Predicated region
        $region57: #{tpu_custom_call.1} parent=11 // pred_check
          %p521 = pneg %p403
        $region58: #{tpu_custom_call.1} parent=11 // pred_check_branch
          %523 = sbr.rel (%p521) target = $region60
        $region59: #{tpu_custom_call.1} parent=11 // pred_region
          _
        $region60: #{tpu_custom_call.1} parent=11 // pred_fallthru
          _
        // Predicated region
        $region61: #{tpu_custom_call.1} parent=11 // pred_check
          %p524 = pneg %p424
        $region62: #{tpu_custom_call.1} parent=11 // pred_check_branch
          %526 = sbr.rel (%p524) target = $region64
        $region63: #{tpu_custom_call.1} parent=11 // pred_region
          _
        $region64: #{tpu_custom_call.1} parent=11 // pred_fallthru
          _
        // Predicated region
        $region65: #{tpu_custom_call.1} parent=11 // pred_check
          %p527 = pneg %p445
        $region66: #{tpu_custom_call.1} parent=11 // pred_check_branch
          %529 = sbr.rel (%p527) target = $region68
        $region67: #{tpu_custom_call.1} parent=11 // pred_region
          _
        $region68: #{tpu_custom_call.1} parent=11 // pred_fallthru
          _
      $region12: #{tpu_custom_call.1} parent=5 // pred_fallthru
        _
      %p530 = scmp.lt.s32.totalorder %s27, 2
      // Predicated region
      $region69: #{tpu_custom_call.1} parent=5 // pred_check
        %p531 = pneg %p530
      $region70: #{tpu_custom_call.1} parent=5 // pred_check_branch
        %533 = sbr.rel (%p531) target = $region72
      $region71: #{tpu_custom_call.1} parent=5 // pred_region
        // Predicated region
        $region73: #{tpu_custom_call.1} parent=71 // pred_check
          %p534 = pneg %p61
        $region74: #{tpu_custom_call.1} parent=71 // pred_check_branch
          %536 = sbr.rel (%p534) target = $region76
        $region75: #{tpu_custom_call.1} parent=71 // pred_region
          %p537 = scmp.lt.s32.totalorder %s34, 1
          %s538 = scalar_select %p537, %s34, 1
          %p539 = scmp.lt.s32.totalorder %s35, 0
          %s540 = scalar_select %p539, %s35, 0
          %s541 = sadd.s32 %s540, %s538
          %s542 = smul.addr %s541, 8
          %s543 = scalar_lea.vmem %s0, %s542
        $region76: #{tpu_custom_call.1} parent=71 // pred_fallthru
          _
        // Predicated region
        $region77: #{tpu_custom_call.1} parent=71 // pred_check
          %p544 = pneg %p89
        $region78: #{tpu_custom_call.1} parent=71 // pred_check_branch
          %546 = sbr.rel (%p544) target = $region80
        $region79: #{tpu_custom_call.1} parent=71 // pred_region
          %s547 = smul.u32 8, %s35
          %p548 = scmp.lt.s32.totalorder %s34, 1
          %s549 = scalar_select %p548, %s34, 1
          %p550 = scmp.lt.s32.totalorder %s547, 7
          %s551 = scalar_select %p550, %s547, 7
          %s552 = smul.addr %s549, 8
          %s553 = sadd.s32 %s551, %s552
          %s554 = smul.addr %s553, 8
          %s555 = scalar_lea.vmem %s1, %s554
          %s556 = smul.u32 8, %s35
        $region80: #{tpu_custom_call.1} parent=71 // pred_fallthru
          _
        // Predicated region
        $region81: #{tpu_custom_call.1} parent=71 // pred_check
          %p557 = pneg %p117
        $region82: #{tpu_custom_call.1} parent=71 // pred_check_branch
          %559 = sbr.rel (%p557) target = $region84
        $region83: #{tpu_custom_call.1} parent=71 // pred_region
          %p560 = scmp.lt.s32.totalorder %s34, 1
          %s561 = scalar_select %p560, %s34, 1
          %p562 = scmp.lt.s32.totalorder %s35, 0
          %s563 = scalar_select %p562, %s35, 0
          %s564 = sadd.s32 %s563, %s561
          %s565 = smul.addr %s564, 8
          %s566 = scalar_lea.vmem %s2, %s565
        $region84: #{tpu_custom_call.1} parent=71 // pred_fallthru
          _
        // Predicated region
        $region85: #{tpu_custom_call.1} parent=71 // pred_check
          %p567 = pneg %p145
        $region86: #{tpu_custom_call.1} parent=71 // pred_check_branch
          %569 = sbr.rel (%p567) target = $region88
        $region87: #{tpu_custom_call.1} parent=71 // pred_region
          %p570 = scmp.lt.s32.totalorder %s34, 1
          %s571 = scalar_select %p570, %s34, 1
          %p572 = scmp.lt.s32.totalorder %s35, 0
          %s573 = scalar_select %p572, %s35, 0
          %s574 = sadd.s32 %s573, %s571
          %s575 = smul.addr %s574, 8
          %s576 = scalar_lea.vmem %s3, %s575
        $region88: #{tpu_custom_call.1} parent=71 // pred_fallthru
          _
      $region72: #{tpu_custom_call.1} parent=5 // pred_fallthru
        _
      %p577 = scmp.le.s32.totalorder 1, %s27
      %p578 = scmp.lt.s32.totalorder %s27, 3
      %p579 = pnand %p577, %p578
      %p580 = pneg %p579
      // Predicated region
      $region89: #{tpu_custom_call.1} parent=5 // pred_check
        _
      $region90: #{tpu_custom_call.1} parent=5 // pred_check_branch
        %582 = sbr.rel (%p579) target = $region92
      $region91: #{tpu_custom_call.1} parent=5 // pred_region
        %s583 = ssub.s32 %s27, 1
        %p584 = scmp.lt.s32.totalorder %s36, 1
        %s585 = scalar_select %p584, %s36, 1
        %p586 = scmp.lt.s32.totalorder %s37, 0
        %s587 = scalar_select %p586, %s37, 0
        %s588 = sadd.s32 %s587, %s585
        %s589 = smul.addr %s588, 8
        %s590 = scalar_lea.vmem %s0, %s589
        %p591 = pneg %p67
        %p592 = pneg %p64
        %s593 = smul.u32 8, %s37
        %p594 = scmp.lt.s32.totalorder %s36, 1
        %s595 = scalar_select %p594, %s36, 1
        %p596 = scmp.lt.s32.totalorder %s593, 7
        %s597 = scalar_select %p596, %s593, 7
        %s598 = smul.addr %s595, 8
        %s599 = sadd.s32 %s597, %s598
        %s600 = smul.addr %s599, 8
        %s601 = scalar_lea.vmem %s1, %s600
        %p602 = pneg %p95
        %p603 = pneg %p92
        %p604 = scmp.lt.s32.totalorder %s36, 1
        %s605 = scalar_select %p604, %s36, 1
        %p606 = scmp.lt.s32.totalorder %s37, 0
        %s607 = scalar_select %p606, %s37, 0
        %s608 = sadd.s32 %s607, %s605
        %s609 = smul.addr %s608, 8
        %s610 = scalar_lea.vmem %s2, %s609
        %p611 = pneg %p123
        %p612 = pneg %p120
        %p613 = scmp.lt.s32.totalorder %s36, 1
        %s614 = scalar_select %p613, %s36, 1
        %p615 = scmp.lt.s32.totalorder %s37, 0
        %s616 = scalar_select %p615, %s37, 0
        %s617 = sadd.s32 %s616, %s614
        %s618 = smul.addr %s617, 8
        %s619 = scalar_lea.vmem %s3, %s618
        %p620 = pneg %p151
        %p621 = pneg %p148
        %p622 = pneg %p172
        %p623 = pneg %p169
        %p624 = pneg %p193
        %p625 = pneg %p190
        %p626 = pneg %p214
        %p627 = pneg %p211
        %p628 = pneg %p235
        %p629 = pneg %p232
        %p630 = pneg %p256
        %p631 = pneg %p253
        %p632 = pneg %p277
        %p633 = pneg %p274
        %p634 = pneg %p298
        %p635 = pneg %p295
        %p636 = pneg %p319
        %p637 = pneg %p316
        %p638 = pneg %p340
        %p639 = pneg %p337
        %p640 = pneg %p361
        %p641 = pneg %p358
        %p642 = pneg %p382
        %p643 = pneg %p379
        %p644 = pneg %p403
        %p645 = pneg %p400
        %p646 = pneg %p424
        %p647 = pneg %p421
        %p648 = pneg %p445
        %p649 = pneg %p442
        %p650 = pneg %p473
        %p651 = pneg %p470
        %s652 = sand.u32 %s460, 1
        %s653 = scalar_lea.sflag [#allocation3], %s652
        %s654 = sand.u32 %s460, 1
        %s655 = smul.addr %s654, 8
        %s656 = scalar_lea.vmem [#allocation2], %s655
        %p657 = scmp.lt.s32.totalorder %s36, 1
        %s658 = scalar_select %p657, %s36, 1
        %p659 = scmp.lt.s32.totalorder %s37, 0
        %s660 = scalar_select %p659, %s37, 0
        %s661 = sadd.s32 %s660, %s658
        %s662 = smul.addr %s661, 8
        %s663 = scalar_lea.vmem %s0, %s662
        %s664 = smul.u32 8, %s37
        %p665 = scmp.lt.s32.totalorder %s36, 1
        %s666 = scalar_select %p665, %s36, 1
        %p667 = scmp.lt.s32.totalorder %s664, 7
        %s668 = scalar_select %p667, %s664, 7
        %s669 = smul.addr %s666, 8
        %s670 = sadd.s32 %s668, %s669
        %s671 = smul.addr %s670, 8
        %s672 = scalar_lea.vmem %s1, %s671
        %s673 = smul.u32 8, %s37
        %p674 = scmp.lt.s32.totalorder %s36, 1
        %s675 = scalar_select %p674, %s36, 1
        %p676 = scmp.lt.s32.totalorder %s37, 0
        %s677 = scalar_select %p676, %s37, 0
        %s678 = sadd.s32 %s677, %s675
        %s679 = smul.addr %s678, 8
        %s680 = scalar_lea.vmem %s2, %s679
        %p681 = scmp.lt.s32.totalorder %s36, 1
        %s682 = scalar_select %p681, %s36, 1
        %p683 = scmp.lt.s32.totalorder %s37, 0
        %s684 = scalar_select %p683, %s37, 0
        %s685 = sadd.s32 %s684, %s682
        %s686 = smul.addr %s685, 8
        %s687 = scalar_lea.vmem %s3, %s686
        %v688 = vld [vmem:[%s663] sm:$0xff]
        %v689 = vld [vmem:[%s672] sm:$0xff]
        %v690 = vld [vmem:[%s672 + $0x8] sm:$0xff]
        %v691 = vld [vmem:[%s672 + $0x10] sm:$0xff]
        %v692 = vld [vmem:[%s672 + $0x18] sm:$0xff]
        %v693 = vld [vmem:[%s672 + $0x20] sm:$0xff]
        %v694 = vld [vmem:[%s672 + $0x28] sm:$0xff]
        %v695 = vld [vmem:[%s672 + $0x30] sm:$0xff]
        %v696 = vld [vmem:[%s672 + $0x38] sm:$0xff]
        %v697 = vld [vmem:[%s680] sm:$0xff]
        %v698 = vld [vmem:[%s687] sm:$0xff]
        %v699 = vld [vmem:[%s6] sm:$0xff]
        %v700 = vld [vmem:[%s6 + $0x8] sm:$0xff]
        %v701 = vld [vmem:[%s6 + $0x10] sm:$0xff]
        %v702 = vld [vmem:[%s6 + $0x18] sm:$0xff]
        %vm703 = vcmask 261120
        %v705 = vsel %vm703, %v688, 0
        %707 = vmatprep.subr.mxu0 0.0
        %708 = vmatpush1.msra.mxu0 %v699
        %709 = vmatprep.subr.mxu0 0.0
        %710 = vmatpush1.msra.mxu0 %v700
        %711 = vmatprep.subr.mxu0 0.0
        %712 = vmatpush1.msra.mxu0 %v701
        %713 = vmatprep.subr.mxu0 0.0
        %714 = vmatpush1.msra.mxu0 %v702
        %715 = vmatprep.subr.mxu0 0.0
        %716 = vmatpush1.msra.mxu0 0.0
        %717 = vmatprep.subr.mxu0 0.0
        %718 = vmatpush1.msra.mxu0 0.0
        %719 = vmatprep.subr.mxu0 0.0
        %720 = vmatpush1.msra.mxu0 0.0
        %721 = vmatprep.subr.mxu0 0.0
        %722 = vmatpush1.msra.mxu0 0.0
        %723 = vmatprep.subr.mxu0 0.0
        %724 = vmatpush1.msra.mxu0 0.0
        %725 = vmatprep.subr.mxu0 0.0
        %726 = vmatpush1.msra.mxu0 0.0
        %727 = vmatprep.subr.mxu0 0.0
        %728 = vmatpush1.msra.mxu0 0.0
        %729 = vmatprep.subr.mxu0 0.0
        %730 = vmatpush1.msra.mxu0 0.0
        %731 = vmatprep.subr.mxu0 0.0
        %732 = vmatpush1.msra.mxu0 0.0
        %733 = vmatprep.subr.mxu0 0.0
        %734 = vmatpush1.msra.mxu0 0.0
        %735 = vmatprep.subr.mxu0 0.0
        %736 = vmatpush1.msra.mxu0 0.0
        %737 = vmatprep.subr.mxu0 0.0
        %738 = vmatpush1.msra.mxu0 0.0
        %739 = vmatprep.subr.mxu0 0.0
        %740 = vmatpush1.msra.mxu0 0.0
        %741 = vmatprep.subr.mxu0 0.0
        %742 = vmatpush1.msra.mxu0 0.0
        %743 = vmatprep.subr.mxu0 0.0
        %744 = vmatpush1.msra.mxu0 0.0
        %745 = vmatprep.subr.mxu0 0.0
        %746 = vmatpush1.msra.mxu0 0.0
        %747 = vmatprep.subr.mxu0 0.0
        %748 = vmatpush1.msra.mxu0 0.0
        %749 = vmatprep.subr.mxu0 0.0
        %750 = vmatpush1.msra.mxu0 0.0
        %751 = vmatprep.subr.mxu0 0.0
        %752 = vmatpush1.msra.mxu0 0.0
        %753 = vmatprep.subr.mxu0 0.0
        %754 = vmatpush1.msra.mxu0 0.0
        %755 = vmatprep.subr.mxu0 0.0
        %756 = vmatpush1.msra.mxu0 0.0
        %757 = vmatprep.subr.mxu0 0.0
        %758 = vmatpush1.msra.mxu0 0.0
        %759 = vmatprep.subr.mxu0 0.0
        %760 = vmatpush1.msra.mxu0 0.0
        %761 = vmatprep.subr.mxu0 0.0
        %762 = vmatpush1.msra.mxu0 0.0
        %763 = vmatprep.subr.mxu0 0.0
        %764 = vmatpush1.msra.mxu0 0.0
        %765 = vmatprep.subr.mxu0 0.0
        %766 = vmatpush1.msra.mxu0 0.0
        %767 = vmatprep.subr.mxu0 0.0
        %768 = vmatpush1.msra.mxu0 0.0
        %769 = vmatprep.subr.mxu0 0.0
        %770 = vmatpush1.msra.mxu0 0.0
        %771 = vmatprep.mubr.f32.mxu0 0.0
        %772 = vmatmul.mubr.f32.gmra.mrb[0].mxu0 %v705
        %v773 = vpop.f32.mrb[0].mxu0
        %v774 = vadd.f32 0.0, %v773
        %v775 = vpop.f32.mrb[0].mxu0
        %776 = vdwg.mxu0
        %v777 = vld [vmem:[%s7] sm:$0xff]
        %v778 = vld [vmem:[%s7 + $0x8] sm:$0xff]
        %v779 = vld [vmem:[%s7 + $0x10] sm:$0xff]
        %v780 = vld [vmem:[%s7 + $0x18] sm:$0xff]
        %v782 = vsel %vm703, %v689, 0
        %v785 = vsel %vm703, %v690, 0
        %v788 = vsel %vm703, %v691, 0
        %v791 = vsel %vm703, %v692, 0
        %v794 = vsel %vm703, %v693, 0
        %v797 = vsel %vm703, %v694, 0
        %v800 = vsel %vm703, %v695, 0
        %v803 = vsel %vm703, %v696, 0
        %805 = vmatprep.subr.mxu0 0.0
        %806 = vmatpush1.msra.mxu0 %v777
        %807 = vmatprep.subr.mxu0 0.0
        %808 = vmatpush1.msra.mxu0 %v778
        %809 = vmatprep.subr.mxu0 0.0
        %810 = vmatpush1.msra.mxu0 %v779
        %811 = vmatprep.subr.mxu0 0.0
        %812 = vmatpush1.msra.mxu0 %v780
        %813 = vmatprep.subr.mxu0 0.0
        %814 = vmatpush1.msra.mxu0 0.0
        %815 = vmatprep.subr.mxu0 0.0
        %816 = vmatpush1.msra.mxu0 0.0
        %817 = vmatprep.subr.mxu0 0.0
        %818 = vmatpush1.msra.mxu0 0.0
        %819 = vmatprep.subr.mxu0 0.0
        %820 = vmatpush1.msra.mxu0 0.0
        %821 = vmatprep.subr.mxu0 0.0
        %822 = vmatpush1.msra.mxu0 0.0
        %823 = vmatprep.subr.mxu0 0.0
        %824 = vmatpush1.msra.mxu0 0.0
        %825 = vmatprep.subr.mxu0 0.0
        %826 = vmatpush1.msra.mxu0 0.0
        %827 = vmatprep.subr.mxu0 0.0
        %828 = vmatpush1.msra.mxu0 0.0
        %829 = vmatprep.subr.mxu0 0.0
        %830 = vmatpush1.msra.mxu0 0.0
        %831 = vmatprep.subr.mxu0 0.0
        %832 = vmatpush1.msra.mxu0 0.0
        %833 = vmatprep.subr.mxu0 0.0
        %834 = vmatpush1.msra.mxu0 0.0
        %835 = vmatprep.subr.mxu0 0.0
        %836 = vmatpush1.msra.mxu0 0.0
        %837 = vmatprep.subr.mxu0 0.0
        %838 = vmatpush1.msra.mxu0 0.0
        %839 = vmatprep.subr.mxu0 0.0
        %840 = vmatpush1.msra.mxu0 0.0
        %841 = vmatprep.subr.mxu0 0.0
        %842 = vmatpush1.msra.mxu0 0.0
        %843 = vmatprep.subr.mxu0 0.0
        %844 = vmatpush1.msra.mxu0 0.0
        %845 = vmatprep.subr.mxu0 0.0
        %846 = vmatpush1.msra.mxu0 0.0
        %847 = vmatprep.subr.mxu0 0.0
        %848 = vmatpush1.msra.mxu0 0.0
        %849 = vmatprep.subr.mxu0 0.0
        %850 = vmatpush1.msra.mxu0 0.0
        %851 = vmatprep.subr.mxu0 0.0
        %852 = vmatpush1.msra.mxu0 0.0
        %853 = vmatprep.subr.mxu0 0.0
        %854 = vmatpush1.msra.mxu0 0.0
        %855 = vmatprep.subr.mxu0 0.0
        %856 = vmatpush1.msra.mxu0 0.0
        %857 = vmatprep.subr.mxu0 0.0
        %858 = vmatpush1.msra.mxu0 0.0
        %859 = vmatprep.subr.mxu0 0.0
        %860 = vmatpush1.msra.mxu0 0.0
        %861 = vmatprep.subr.mxu0 0.0
        %862 = vmatpush1.msra.mxu0 0.0
        %863 = vmatprep.subr.mxu0 0.0
        %864 = vmatpush1.msra.mxu0 0.0
        %865 = vmatprep.subr.mxu0 0.0
        %866 = vmatpush1.msra.mxu0 0.0
        %867 = vmatprep.subr.mxu0 0.0
        %868 = vmatpush1.msra.mxu0 0.0
        %869 = vmatprep.mubr.f32.mxu0 0.0
        %870 = vmatmul.mubr.f32.gmra.mrb[0].mxu0 %v782
        %v871 = vpop.f32.mrb[0].mxu0
        %v872 = vadd.f32 0.0, %v871
        %v873 = vpop.f32.mrb[0].mxu0
        %874 = vmatprep.mubr.f32.mxu0 0.0
        %875 = vmatmul.mubr.f32.gmra.mrb[0].mxu0 %v785
        %v876 = vpop.f32.mrb[0].mxu0
        %v877 = vadd.f32 0.0, %v876
        %v878 = vpop.f32.mrb[0].mxu0
        %879 = vmatprep.mubr.f32.mxu0 0.0
        %880 = vmatmul.mubr.f32.gmra.mrb[0].mxu0 %v788
        %v881 = vpop.f32.mrb[0].mxu0
        %v882 = vadd.f32 0.0, %v881
        %v883 = vpop.f32.mrb[0].mxu0
        %884 = vmatprep.mubr.f32.mxu0 0.0
        %885 = vmatmul.mubr.f32.gmra.mrb[0].mxu0 %v791
        %v886 = vpop.f32.mrb[0].mxu0
        %v887 = vadd.f32 0.0, %v886
        %v888 = vpop.f32.mrb[0].mxu0
        %889 = vmatprep.mubr.f32.mxu0 0.0
        %890 = vmatmul.mubr.f32.gmra.mrb[0].mxu0 %v794
        %v891 = vpop.f32.mrb[0].mxu0
        %v892 = vadd.f32 0.0, %v891
        %v893 = vpop.f32.mrb[0].mxu0
        %894 = vmatprep.mubr.f32.mxu0 0.0
        %895 = vmatmul.mubr.f32.gmra.mrb[0].mxu0 %v797
        %v896 = vpop.f32.mrb[0].mxu0
        %v897 = vadd.f32 0.0, %v896
        %v898 = vpop.f32.mrb[0].mxu0
        %899 = vmatprep.mubr.f32.mxu0 0.0
        %900 = vmatmul.mubr.f32.gmra.mrb[0].mxu0 %v800
        %v901 = vpop.f32.mrb[0].mxu0
        %v902 = vadd.f32 0.0, %v901
        %v903 = vpop.f32.mrb[0].mxu0
        %904 = vmatprep.mubr.f32.mxu0 0.0
        %905 = vmatmul.mubr.f32.gmra.mrb[0].mxu0 %v803
        %v906 = vpop.f32.mrb[0].mxu0
        %v907 = vadd.f32 0.0, %v906
        %v908 = vpop.f32.mrb[0].mxu0
        %909 = vdwg.mxu0
        %v910 = vld [vmem:[%s8] sm:$0xff]
        %v911 = vld [vmem:[%s8 + $0x8] sm:$0xff]
        %v912 = vld [vmem:[%s8 + $0x10] sm:$0xff]
        %v913 = vld [vmem:[%s8 + $0x18] sm:$0xff]
        %914 = vmatprep.subr.mxu0 0.0
        %915 = vmatpush1.msra.mxu0 %v910
        %916 = vmatprep.subr.mxu0 0.0
        %917 = vmatpush1.msra.mxu0 %v911
        %918 = vmatprep.subr.mxu0 0.0
        %919 = vmatpush1.msra.mxu0 %v912
        %920 = vmatprep.subr.mxu0 0.0
        %921 = vmatpush1.msra.mxu0 %v913
        %922 = vmatprep.subr.mxu0 0.0
        %923 = vmatpush1.msra.mxu0 0.0
        %924 = vmatprep.subr.mxu0 0.0
        %925 = vmatpush1.msra.mxu0 0.0
        %926 = vmatprep.subr.mxu0 0.0
        %927 = vmatpush1.msra.mxu0 0.0
        %928 = vmatprep.subr.mxu0 0.0
        %929 = vmatpush1.msra.mxu0 0.0
        %930 = vmatprep.subr.mxu0 0.0
        %931 = vmatpush1.msra.mxu0 0.0
        %932 = vmatprep.subr.mxu0 0.0
        %933 = vmatpush1.msra.mxu0 0.0
        %934 = vmatprep.subr.mxu0 0.0
        %935 = vmatpush1.msra.mxu0 0.0
        %936 = vmatprep.subr.mxu0 0.0
        %937 = vmatpush1.msra.mxu0 0.0
        %938 = vmatprep.subr.mxu0 0.0
        %939 = vmatpush1.msra.mxu0 0.0
        %940 = vmatprep.subr.mxu0 0.0
        %941 = vmatpush1.msra.mxu0 0.0
        %942 = vmatprep.subr.mxu0 0.0
        %943 = vmatpush1.msra.mxu0 0.0
        %944 = vmatprep.subr.mxu0 0.0
        %945 = vmatpush1.msra.mxu0 0.0
        %946 = vmatprep.subr.mxu0 0.0
        %947 = vmatpush1.msra.mxu0 0.0
        %948 = vmatprep.subr.mxu0 0.0
        %949 = vmatpush1.msra.mxu0 0.0
        %950 = vmatprep.subr.mxu0 0.0
        %951 = vmatpush1.msra.mxu0 0.0
        %952 = vmatprep.subr.mxu0 0.0
        %953 = vmatpush1.msra.mxu0 0.0
        %954 = vmatprep.subr.mxu0 0.0
        %955 = vmatpush1.msra.mxu0 0.0
        %956 = vmatprep.subr.mxu0 0.0
        %957 = vmatpush1.msra.mxu0 0.0
        %958 = vmatprep.subr.mxu0 0.0
        %959 = vmatpush1.msra.mxu0 0.0
        %960 = vmatprep.subr.mxu0 0.0
        %961 = vmatpush1.msra.mxu0 0.0
        %962 = vmatprep.subr.mxu0 0.0
        %963 = vmatpush1.msra.mxu0 0.0
        %964 = vmatprep.subr.mxu0 0.0
        %965 = vmatpush1.msra.mxu0 0.0
        %966 = vmatprep.subr.mxu0 0.0
        %967 = vmatpush1.msra.mxu0 0.0
        %968 = vmatprep.subr.mxu0 0.0
        %969 = vmatpush1.msra.mxu0 0.0
        %970 = vmatprep.subr.mxu0 0.0
        %971 = vmatpush1.msra.mxu0 0.0
        %972 = vmatprep.subr.mxu0 0.0
        %973 = vmatpush1.msra.mxu0 0.0
        %974 = vmatprep.subr.mxu0 0.0
        %975 = vmatpush1.msra.mxu0 0.0
        %976 = vmatprep.subr.mxu0 0.0
        %977 = vmatpush1.msra.mxu0 0.0
        %978 = vmatprep.mubr.f32.mxu0 0.0
        %979 = vmatmul.mubr.f32.gmra.mrb[0].mxu0 %v782
        %v980 = vpop.f32.mrb[0].mxu0
        %v981 = vadd.f32 0.0, %v980
        %v982 = vpop.f32.mrb[0].mxu0
        %983 = vmatprep.mubr.f32.mxu0 0.0
        %984 = vmatmul.mubr.f32.gmra.mrb[0].mxu0 %v785
        %v985 = vpop.f32.mrb[0].mxu0
        %v986 = vadd.f32 0.0, %v985
        %v987 = vpop.f32.mrb[0].mxu0
        %988 = vmatprep.mubr.f32.mxu0 0.0
        %989 = vmatmul.mubr.f32.gmra.mrb[0].mxu0 %v788
        %v990 = vpop.f32.mrb[0].mxu0
        %v991 = vadd.f32 0.0, %v990
        %v992 = vpop.f32.mrb[0].mxu0
        %993 = vmatprep.mubr.f32.mxu0 0.0
        %994 = vmatmul.mubr.f32.gmra.mrb[0].mxu0 %v791
        %v995 = vpop.f32.mrb[0].mxu0
        %v996 = vadd.f32 0.0, %v995
        %v997 = vpop.f32.mrb[0].mxu0
        %998 = vmatprep.mubr.f32.mxu0 0.0
        %999 = vmatmul.mubr.f32.gmra.mrb[0].mxu0 %v794
        %v1000 = vpop.f32.mrb[0].mxu0
        %v1001 = vadd.f32 0.0, %v1000
        %v1002 = vpop.f32.mrb[0].mxu0
        %1003 = vmatprep.mubr.f32.mxu0 0.0
        %1004 = vmatmul.mubr.f32.gmra.mrb[0].mxu0 %v797
        %v1005 = vpop.f32.mrb[0].mxu0
        %v1006 = vadd.f32 0.0, %v1005
        %v1007 = vpop.f32.mrb[0].mxu0
        %1008 = vmatprep.mubr.f32.mxu0 0.0
        %1009 = vmatmul.mubr.f32.gmra.mrb[0].mxu0 %v800
        %v1010 = vpop.f32.mrb[0].mxu0
        %v1011 = vadd.f32 0.0, %v1010
        %v1012 = vpop.f32.mrb[0].mxu0
        %1013 = vmatprep.mubr.f32.mxu0 0.0
        %1014 = vmatmul.mubr.f32.gmra.mrb[0].mxu0 %v803
        %v1015 = vpop.f32.mrb[0].mxu0
        %v1016 = vadd.f32 0.0, %v1015
        %v1017 = vpop.f32.mrb[0].mxu0
        %1018 = vdwg.mxu0
        %v1020 = vcombine.high %v774, %v774
        %v1022 = vunpack.c.l.s4 1966171168
        %v1023 = vunpack.c.0.s8 %v1022
        %v1024 = vlaneseq
        %v1025 = vshrl.u32 %v1024, 7
        %v1026 = vsub.s32 %v1023, %v1025
        %v1027 = vrot.slane %v774, %v1026
        %v1029 = vunpack.c.l.s4 1966171168
        %v1030 = vunpack.c.0.s8 %v1029
        %v1031 = vlaneseq
        %v1032 = vshrl.u32 %v1031, 7
        %v1033 = vsub.s32 %v1030, %v1032
        %v1034 = vrot.slane %v1020, %v1033
        %v1035 = vcombine.high %v1027, %v1027
        %v1036 = vcombine.high %v1034, %v1034
        %v1038 = vunpack.c.l.s4 1966171168
        %v1039 = vunpack.c.0.s8 %v1038
        %v1040 = vlaneseq
        %v1041 = vshrl.u32 %v1040, 7
        %v1042 = vsub.s32 %v1039, %v1041
        %v1043 = vrot.slane %v1027, %v1042
        %v1045 = vunpack.c.l.s4 1966171168
        %v1046 = vunpack.c.0.s8 %v1045
        %v1047 = vlaneseq
        %v1048 = vshrl.u32 %v1047, 7
        %v1049 = vsub.s32 %v1046, %v1048
        %v1050 = vrot.slane %v1034, %v1049
        %v1052 = vunpack.c.l.s4 1966171168
        %v1053 = vunpack.c.0.s8 %v1052
        %v1054 = vlaneseq
        %v1055 = vshrl.u32 %v1054, 7
        %v1056 = vsub.s32 %v1053, %v1055
        %v1057 = vrot.slane %v1035, %v1056
        %v1059 = vunpack.c.l.s4 1966171168
        %v1060 = vunpack.c.0.s8 %v1059
        %v1061 = vlaneseq
        %v1062 = vshrl.u32 %v1061, 7
        %v1063 = vsub.s32 %v1060, %v1062
        %v1064 = vrot.slane %v1036, %v1063
        %v1065 = vcombine.high %v1043, %v1043
        %v1066 = vcombine.high %v1050, %v1050
        %v1067 = vcombine.high %v1057, %v1057
        %v1068 = vcombine.high %v1064, %v1064
        %v1069 = vlaneseq
        %v1070 = vshrl.u32 %v1069, 7
        %v1071 = vsub.s32 0, %v1070
        %v1072 = vrot.slane %v1043, %v1071
        %v1073 = vlaneseq
        %v1074 = vshrl.u32 %v1073, 7
        %v1075 = vsub.s32 0, %v1074
        %v1076 = vrot.slane %v1057, %v1075
        %v1077 = vlaneseq
        %v1078 = vshrl.u32 %v1077, 7
        %v1079 = vsub.s32 0, %v1078
        %v1080 = vrot.slane %v1065, %v1079
        %v1081 = vlaneseq
        %v1082 = vshrl.u32 %v1081, 7
        %v1083 = vsub.s32 0, %v1082
        %v1084 = vrot.slane %v1067, %v1083
        %v1085 = vlaneseq
        %v1086 = vshrl.u32 %v1085, 7
        %v1087 = vsub.s32 0, %v1086
        %v1088 = vrot.slane %v1050, %v1087
        %v1089 = vlaneseq
        %v1090 = vshrl.u32 %v1089, 7
        %v1091 = vsub.s32 0, %v1090
        %v1092 = vrot.slane %v1064, %v1091
        %v1093 = vlaneseq
        %v1094 = vshrl.u32 %v1093, 7
        %v1095 = vsub.s32 0, %v1094
        %v1096 = vrot.slane %v1066, %v1095
        %v1097 = vlaneseq
        %v1098 = vshrl.u32 %v1097, 7
        %v1099 = vsub.s32 0, %v1098
        %v1100 = vrot.slane %v1068, %v1099
        %v1109 = vmul.f32 %v1072, %v872
        %v1110 = vmul.f32 %v1076, %v877
        %v1111 = vmul.f32 %v1080, %v882
        %v1112 = vmul.f32 %v1084, %v887
        %v1113 = vmul.f32 %v1088, %v892
        %v1114 = vmul.f32 %v1092, %v897
        %v1115 = vmul.f32 %v1096, %v902
        %v1116 = vmul.f32 %v1100, %v907
        %v1117 = vld [vmem:[%s4] sm:$0xff]
        %v1118 = vld [vmem:[%s4 + $0x8] sm:$0xff]
        %v1119 = vld [vmem:[%s4 + $0x10] sm:$0xff]
        %v1120 = vld [vmem:[%s4 + $0x18] sm:$0xff]
        %v1122 = vsel %vm703, %v1109, 0
        %v1125 = vsel %vm703, %v1110, 0
        %v1128 = vsel %vm703, %v1111, 0
        %v1131 = vsel %vm703, %v1112, 0
        %v1134 = vsel %vm703, %v1113, 0
        %v1137 = vsel %vm703, %v1114, 0
        %v1140 = vsel %vm703, %v1115, 0
        %v1143 = vsel %vm703, %v1116, 0
        %1145 = vmatprep.subr.mxu0 0.0
        %1146 = vmatpush1.msra.mxu0 %v1117
        %1147 = vmatprep.subr.mxu0 0.0
        %1148 = vmatpush1.msra.mxu0 %v1118
        %1149 = vmatprep.subr.mxu0 0.0
        %1150 = vmatpush1.msra.mxu0 %v1119
        %1151 = vmatprep.subr.mxu0 0.0
        %1152 = vmatpush1.msra.mxu0 %v1120
        %1153 = vmatprep.subr.mxu0 0.0
        %1154 = vmatpush1.msra.mxu0 0.0
        %1155 = vmatprep.subr.mxu0 0.0
        %1156 = vmatpush1.msra.mxu0 0.0
        %1157 = vmatprep.subr.mxu0 0.0
        %1158 = vmatpush1.msra.mxu0 0.0
        %1159 = vmatprep.subr.mxu0 0.0
        %1160 = vmatpush1.msra.mxu0 0.0
        %1161 = vmatprep.subr.mxu0 0.0
        %1162 = vmatpush1.msra.mxu0 0.0
        %1163 = vmatprep.subr.mxu0 0.0
        %1164 = vmatpush1.msra.mxu0 0.0
        %1165 = vmatprep.subr.mxu0 0.0
        %1166 = vmatpush1.msra.mxu0 0.0
        %1167 = vmatprep.subr.mxu0 0.0
        %1168 = vmatpush1.msra.mxu0 0.0
        %1169 = vmatprep.subr.mxu0 0.0
        %1170 = vmatpush1.msra.mxu0 0.0
        %1171 = vmatprep.subr.mxu0 0.0
        %1172 = vmatpush1.msra.mxu0 0.0
        %1173 = vmatprep.subr.mxu0 0.0
        %1174 = vmatpush1.msra.mxu0 0.0
        %1175 = vmatprep.subr.mxu0 0.0
        %1176 = vmatpush1.msra.mxu0 0.0
        %1177 = vmatprep.subr.mxu0 0.0
        %1178 = vmatpush1.msra.mxu0 0.0
        %1179 = vmatprep.subr.mxu0 0.0
        %1180 = vmatpush1.msra.mxu0 0.0
        %1181 = vmatprep.subr.mxu0 0.0
        %1182 = vmatpush1.msra.mxu0 0.0
        %1183 = vmatprep.subr.mxu0 0.0
        %1184 = vmatpush1.msra.mxu0 0.0
        %1185 = vmatprep.subr.mxu0 0.0
        %1186 = vmatpush1.msra.mxu0 0.0
        %1187 = vmatprep.subr.mxu0 0.0
        %1188 = vmatpush1.msra.mxu0 0.0
        %1189 = vmatprep.subr.mxu0 0.0
        %1190 = vmatpush1.msra.mxu0 0.0
        %1191 = vmatprep.subr.mxu0 0.0
        %1192 = vmatpush1.msra.mxu0 0.0
        %1193 = vmatprep.subr.mxu0 0.0
        %1194 = vmatpush1.msra.mxu0 0.0
        %1195 = vmatprep.subr.mxu0 0.0
        %1196 = vmatpush1.msra.mxu0 0.0
        %1197 = vmatprep.subr.mxu0 0.0
        %1198 = vmatpush1.msra.mxu0 0.0
        %1199 = vmatprep.subr.mxu0 0.0
        %1200 = vmatpush1.msra.mxu0 0.0
        %1201 = vmatprep.subr.mxu0 0.0
        %1202 = vmatpush1.msra.mxu0 0.0
        %1203 = vmatprep.subr.mxu0 0.0
        %1204 = vmatpush1.msra.mxu0 0.0
        %1205 = vmatprep.subr.mxu0 0.0
        %1206 = vmatpush1.msra.mxu0 0.0
        %1207 = vmatprep.subr.mxu0 0.0
        %1208 = vmatpush1.msra.mxu0 0.0
        %1209 = vmatprep.mubr.f32.mxu0 0.0
        %1210 = vmatmul.mubr.f32.gmra.mrb[0].mxu0 %v1122
        %v1211 = vpop.f32.mrb[0].mxu0
        %v1212 = vadd.f32 0.0, %v1211
        %v1213 = vpop.f32.mrb[0].mxu0
        %1214 = vmatprep.mubr.f32.mxu0 0.0
        %1215 = vmatmul.mubr.f32.gmra.mrb[0].mxu0 %v1125
        %v1216 = vpop.f32.mrb[0].mxu0
        %v1217 = vadd.f32 0.0, %v1216
        %v1218 = vpop.f32.mrb[0].mxu0
        %1219 = vmatprep.mubr.f32.mxu0 0.0
        %1220 = vmatmul.mubr.f32.gmra.mrb[0].mxu0 %v1128
        %v1221 = vpop.f32.mrb[0].mxu0
        %v1222 = vadd.f32 0.0, %v1221
        %v1223 = vpop.f32.mrb[0].mxu0
        %1224 = vmatprep.mubr.f32.mxu0 0.0
        %1225 = vmatmul.mubr.f32.gmra.mrb[0].mxu0 %v1131
        %v1226 = vpop.f32.mrb[0].mxu0
        %v1227 = vadd.f32 0.0, %v1226
        %v1228 = vpop.f32.mrb[0].mxu0
        %1229 = vmatprep.mubr.f32.mxu0 0.0
        %1230 = vmatmul.mubr.f32.gmra.mrb[0].mxu0 %v1134
        %v1231 = vpop.f32.mrb[0].mxu0
        %v1232 = vadd.f32 0.0, %v1231
        %v1233 = vpop.f32.mrb[0].mxu0
        %1234 = vmatprep.mubr.f32.mxu0 0.0
        %1235 = vmatmul.mubr.f32.gmra.mrb[0].mxu0 %v1137
        %v1236 = vpop.f32.mrb[0].mxu0
        %v1237 = vadd.f32 0.0, %v1236
        %v1238 = vpop.f32.mrb[0].mxu0
        %1239 = vmatprep.mubr.f32.mxu0 0.0
        %1240 = vmatmul.mubr.f32.gmra.mrb[0].mxu0 %v1140
        %v1241 = vpop.f32.mrb[0].mxu0
        %v1242 = vadd.f32 0.0, %v1241
        %v1243 = vpop.f32.mrb[0].mxu0
        %1244 = vmatprep.mubr.f32.mxu0 0.0
        %1245 = vmatmul.mubr.f32.gmra.mrb[0].mxu0 %v1143
        %v1246 = vpop.f32.mrb[0].mxu0
        %v1247 = vadd.f32 0.0, %v1246
        %v1248 = vpop.f32.mrb[0].mxu0
        %1249 = vdwg.mxu0
        %v1250 = vmul.f32 %v1212, 0.35355338
        %v1251 = vmul.f32 %v1217, 0.35355338
        %v1252 = vmul.f32 %v1222, 0.35355338
        %v1253 = vmul.f32 %v1227, 0.35355338
        %v1254 = vmul.f32 %v1232, 0.35355338
        %v1255 = vmul.f32 %v1237, 0.35355338
        %v1256 = vmul.f32 %v1242, 0.35355338
        %v1257 = vmul.f32 %v1247, 0.35355338
        %v1258 = vlaneseq
        %v1259 = vshrl.u32 %v1258, 7
        %v1260 = vsub.s32 0, %v1259
        %v1261 = vrot.slane %v697, %v1260
        %1263 = vbcast.lane.b32.xlu0 %v1261, 256
        %v1264 = vpop.permute.xlu0 %1263
        %v1265 = vlaneseq
        %v1266 = vshrl.u32 %v1265, 7
        %v1267 = vsub.s32 1, %v1266
        %v1268 = vrot.slane %v697, %v1267
        %1270 = vbcast.lane.b32.xlu0 %v1268, 256
        %v1271 = vpop.permute.xlu0 %1270
        %v1272 = vlaneseq
        %v1273 = vshrl.u32 %v1272, 7
        %v1274 = vsub.s32 2, %v1273
        %v1275 = vrot.slane %v697, %v1274
        %1277 = vbcast.lane.b32.xlu0 %v1275, 256
        %v1278 = vpop.permute.xlu0 %1277
        %v1279 = vlaneseq
        %v1280 = vshrl.u32 %v1279, 7
        %v1281 = vsub.s32 3, %v1280
        %v1282 = vrot.slane %v697, %v1281
        %1284 = vbcast.lane.b32.xlu0 %v1282, 256
        %v1285 = vpop.permute.xlu0 %1284
        %v1286 = vlaneseq
        %v1287 = vshrl.u32 %v1286, 7
        %v1288 = vsub.s32 4, %v1287
        %v1289 = vrot.slane %v697, %v1288
        %1291 = vbcast.lane.b32.xlu0 %v1289, 256
        %v1292 = vpop.permute.xlu0 %1291
        %v1293 = vlaneseq
        %v1294 = vshrl.u32 %v1293, 7
        %v1295 = vsub.s32 5, %v1294
        %v1296 = vrot.slane %v697, %v1295
        %1298 = vbcast.lane.b32.xlu0 %v1296, 256
        %v1299 = vpop.permute.xlu0 %1298
        %v1300 = vlaneseq
        %v1301 = vshrl.u32 %v1300, 7
        %v1302 = vsub.s32 6, %v1301
        %v1303 = vrot.slane %v697, %v1302
        %1305 = vbcast.lane.b32.xlu0 %v1303, 256
        %v1306 = vpop.permute.xlu0 %1305
        %v1307 = vlaneseq
        %v1308 = vshrl.u32 %v1307, 7
        %v1309 = vsub.s32 7, %v1308
        %v1310 = vrot.slane %v697, %v1309
        %1312 = vbcast.lane.b32.xlu0 %v1310, 256
        %v1313 = vpop.permute.xlu0 %1312
        %vm1314 = vcmp.gt.f32.partialorder %v1264, 0.0
        %vm1315 = vcmp.gt.f32.partialorder %v1271, 0.0
        %vm1316 = vcmp.gt.f32.partialorder %v1278, 0.0
        %vm1317 = vcmp.gt.f32.partialorder %v1285, 0.0
        %vm1318 = vcmp.gt.f32.partialorder %v1292, 0.0
        %vm1319 = vcmp.gt.f32.partialorder %v1299, 0.0
        %vm1320 = vcmp.gt.f32.partialorder %v1306, 0.0
        %vm1321 = vcmp.gt.f32.partialorder %v1313, 0.0
        %v1322 = vsel %vm1314, 1, 0
        %v1323 = vsel %vm1315, 1, 0
        %v1324 = vsel %vm1316, 1, 0
        %v1325 = vsel %vm1317, 1, 0
        %v1326 = vsel %vm1318, 1, 0
        %v1327 = vsel %vm1319, 1, 0
        %v1328 = vsel %vm1320, 1, 0
        %v1329 = vsel %vm1321, 1, 0
        %vm1330 = vcmp.eq.s32.totalorder %v1322, 1
        %vm1331 = vcmp.eq.s32.totalorder %v1323, 1
        %vm1332 = vcmp.eq.s32.totalorder %v1324, 1
        %vm1333 = vcmp.eq.s32.totalorder %v1325, 1
        %vm1334 = vcmp.eq.s32.totalorder %v1326, 1
        %vm1335 = vcmp.eq.s32.totalorder %v1327, 1
        %vm1336 = vcmp.eq.s32.totalorder %v1328, 1
        %vm1337 = vcmp.eq.s32.totalorder %v1329, 1
        %v1338 = vsel %vm1330, %v1250, -3.4028235e+38
        %v1339 = vsel %vm1331, %v1251, -3.4028235e+38
        %v1340 = vsel %vm1332, %v1252, -3.4028235e+38
        %v1341 = vsel %vm1333, %v1253, -3.4028235e+38
        %v1342 = vsel %vm1334, %v1254, -3.4028235e+38
        %v1343 = vsel %vm1335, %v1255, -3.4028235e+38
        %v1344 = vsel %vm1336, %v1256, -3.4028235e+38
        %v1345 = vsel %vm1337, %v1257, -3.4028235e+38
        %vm1346 = vcmask 31744
        %v1347 = vsel %vm1346, %v1338, -inf
        %v1348 = vrot.slane %v1347, 4
        %v1349 = vmax.f32 %v1347, %v1348
        %v1350 = vrot.slane %v1349, 2
        %v1351 = vmax.f32 %v1349, %v1350
        %v1352 = vrot.slane %v1351, 1
        %v1353 = vmax.f32 %v1351, %v1352
        %v1354 = vsel %vm1346, %v1339, -inf
        %v1355 = vrot.slane %v1354, 4
        %v1356 = vmax.f32 %v1354, %v1355
        %v1357 = vrot.slane %v1356, 2
        %v1358 = vmax.f32 %v1356, %v1357
        %v1359 = vrot.slane %v1358, 1
        %v1360 = vmax.f32 %v1358, %v1359
        %v1361 = vsel %vm1346, %v1340, -inf
        %v1362 = vrot.slane %v1361, 4
        %v1363 = vmax.f32 %v1361, %v1362
        %v1364 = vrot.slane %v1363, 2
        %v1365 = vmax.f32 %v1363, %v1364
        %v1366 = vrot.slane %v1365, 1
        %v1367 = vmax.f32 %v1365, %v1366
        %v1368 = vsel %vm1346, %v1341, -inf
        %v1369 = vrot.slane %v1368, 4
        %v1370 = vmax.f32 %v1368, %v1369
        %v1371 = vrot.slane %v1370, 2
        %v1372 = vmax.f32 %v1370, %v1371
        %v1373 = vrot.slane %v1372, 1
        %v1374 = vmax.f32 %v1372, %v1373
        %v1375 = vsel %vm1346, %v1342, -inf
        %v1376 = vrot.slane %v1375, 4
        %v1377 = vmax.f32 %v1375, %v1376
        %v1378 = vrot.slane %v1377, 2
        %v1379 = vmax.f32 %v1377, %v1378
        %v1380 = vrot.slane %v1379, 1
        %v1381 = vmax.f32 %v1379, %v1380
        %v1382 = vsel %vm1346, %v1343, -inf
        %v1383 = vrot.slane %v1382, 4
        %v1384 = vmax.f32 %v1382, %v1383
        %v1385 = vrot.slane %v1384, 2
        %v1386 = vmax.f32 %v1384, %v1385
        %v1387 = vrot.slane %v1386, 1
        %v1388 = vmax.f32 %v1386, %v1387
        %v1389 = vsel %vm1346, %v1344, -inf
        %v1390 = vrot.slane %v1389, 4
        %v1391 = vmax.f32 %v1389, %v1390
        %v1392 = vrot.slane %v1391, 2
        %v1393 = vmax.f32 %v1391, %v1392
        %v1394 = vrot.slane %v1393, 1
        %v1395 = vmax.f32 %v1393, %v1394
        %v1396 = vsel %vm1346, %v1345, -inf
        %v1397 = vrot.slane %v1396, 4
        %v1398 = vmax.f32 %v1396, %v1397
        %v1399 = vrot.slane %v1398, 2
        %v1400 = vmax.f32 %v1398, %v1399
        %v1401 = vrot.slane %v1400, 1
        %v1402 = vmax.f32 %v1400, %v1401
        %v1403 = vsub.f32 %v1338, %v1353
        %v1404 = vsub.f32 %v1339, %v1360
        %v1405 = vsub.f32 %v1340, %v1367
        %v1406 = vsub.f32 %v1341, %v1374
        %v1407 = vsub.f32 %v1342, %v1381
        %v1408 = vsub.f32 %v1343, %v1388
        %v1409 = vsub.f32 %v1344, %v1395
        %v1410 = vsub.f32 %v1345, %v1402
        %v1411 = vmul.f32 %v1403, 1.442695
        %v1412 = vpow.pop %v1411
        %v1413 = vmul.f32 %v1404, 1.442695
        %v1414 = vpow.pop %v1413
        %v1415 = vmul.f32 %v1405, 1.442695
        %v1416 = vpow.pop %v1415
        %v1417 = vmul.f32 %v1406, 1.442695
        %v1418 = vpow.pop %v1417
        %v1419 = vmul.f32 %v1407, 1.442695
        %v1420 = vpow.pop %v1419
        %v1421 = vmul.f32 %v1408, 1.442695
        %v1422 = vpow.pop %v1421
        %v1423 = vmul.f32 %v1409, 1.442695
        %v1424 = vpow.pop %v1423
        %v1425 = vmul.f32 %v1410, 1.442695
        %v1426 = vpow.pop %v1425
        %v1427 = vsel %vm1346, %v1412, 0.0
        %v1428 = vrot.slane %v1427, 4
        %v1429 = vadd.f32 %v1427, %v1428
        %v1430 = vrot.slane %v1429, 2
        %v1431 = vadd.f32 %v1429, %v1430
        %v1432 = vrot.slane %v1431, 1
        %v1433 = vadd.f32 %v1431, %v1432
        %v1434 = vsel %vm1346, %v1414, 0.0
        %v1435 = vrot.slane %v1434, 4
        %v1436 = vadd.f32 %v1434, %v1435
        %v1437 = vrot.slane %v1436, 2
        %v1438 = vadd.f32 %v1436, %v1437
        %v1439 = vrot.slane %v1438, 1
        %v1440 = vadd.f32 %v1438, %v1439
        %v1441 = vsel %vm1346, %v1416, 0.0
        %v1442 = vrot.slane %v1441, 4
        %v1443 = vadd.f32 %v1441, %v1442
        %v1444 = vrot.slane %v1443, 2
        %v1445 = vadd.f32 %v1443, %v1444
        %v1446 = vrot.slane %v1445, 1
        %v1447 = vadd.f32 %v1445, %v1446
        %v1448 = vsel %vm1346, %v1418, 0.0
        %v1449 = vrot.slane %v1448, 4
        %v1450 = vadd.f32 %v1448, %v1449
        %v1451 = vrot.slane %v1450, 2
        %v1452 = vadd.f32 %v1450, %v1451
        %v1453 = vrot.slane %v1452, 1
        %v1454 = vadd.f32 %v1452, %v1453
        %v1455 = vsel %vm1346, %v1420, 0.0
        %v1456 = vrot.slane %v1455, 4
        %v1457 = vadd.f32 %v1455, %v1456
        %v1458 = vrot.slane %v1457, 2
        %v1459 = vadd.f32 %v1457, %v1458
        %v1460 = vrot.slane %v1459, 1
        %v1461 = vadd.f32 %v1459, %v1460
        %v1462 = vsel %vm1346, %v1422, 0.0
        %v1463 = vrot.slane %v1462, 4
        %v1464 = vadd.f32 %v1462, %v1463
        %v1465 = vrot.slane %v1464, 2
        %v1466 = vadd.f32 %v1464, %v1465
        %v1467 = vrot.slane %v1466, 1
        %v1468 = vadd.f32 %v1466, %v1467
        %v1469 = vsel %vm1346, %v1424, 0.0
        %v1470 = vrot.slane %v1469, 4
        %v1471 = vadd.f32 %v1469, %v1470
        %v1472 = vrot.slane %v1471, 2
        %v1473 = vadd.f32 %v1471, %v1472
        %v1474 = vrot.slane %v1473, 1
        %v1475 = vadd.f32 %v1473, %v1474
        %v1476 = vsel %vm1346, %v1426, 0.0
        %v1477 = vrot.slane %v1476, 4
        %v1478 = vadd.f32 %v1476, %v1477
        %v1479 = vrot.slane %v1478, 2
        %v1480 = vadd.f32 %v1478, %v1479
        %v1481 = vrot.slane %v1480, 1
        %v1482 = vadd.f32 %v1480, %v1481
        %v1483 = vrcp.pop %v1433
        %v1484 = vmul.f32 %v1412, %v1483
        %v1485 = vrcp.pop %v1440
        %v1486 = vmul.f32 %v1414, %v1485
        %v1487 = vrcp.pop %v1447
        %v1488 = vmul.f32 %v1416, %v1487
        %v1489 = vrcp.pop %v1454
        %v1490 = vmul.f32 %v1418, %v1489
        %v1491 = vrcp.pop %v1461
        %v1492 = vmul.f32 %v1420, %v1491
        %v1493 = vrcp.pop %v1468
        %v1494 = vmul.f32 %v1422, %v1493
        %v1495 = vrcp.pop %v1475
        %v1496 = vmul.f32 %v1424, %v1495
        %v1497 = vrcp.pop %v1482
        %v1498 = vmul.f32 %v1426, %v1497
        %v1499 = vmul.f32 %v1484, %v1264
        %v1500 = vmul.f32 %v1486, %v1271
        %v1501 = vmul.f32 %v1488, %v1278
        %v1502 = vmul.f32 %v1490, %v1285
        %v1503 = vmul.f32 %v1492, %v1292
        %v1504 = vmul.f32 %v1494, %v1299
        %v1505 = vmul.f32 %v1496, %v1306
        %v1506 = vmul.f32 %v1498, %v1313
        %v1507 = vld [vmem:[%s5] sm:$0xf]
        %v1509 = vsel %vm1346, %v1499, 0
        %v1512 = vsel %vm1346, %v1500, 0
        %v1515 = vsel %vm1346, %v1501, 0
        %v1518 = vsel %vm1346, %v1502, 0
        %v1521 = vsel %vm1346, %v1503, 0
        %v1524 = vsel %vm1346, %v1504, 0
        %v1527 = vsel %vm1346, %v1505, 0
        %v1530 = vsel %vm1346, %v1506, 0
        %vm1532 = vcmask 1043456
        %v1534 = vsel %vm1532, %v1507, 0
        %1536 = vmatprep.subr.mxu0 0.0
        %1537 = vmatpush1.msra.mxu0 %v1534
        %1538 = vmatprep.subr.mxu0 0.0
        %1539 = vmatpush1.msra.mxu0 0.0
        %1540 = vmatprep.subr.mxu0 0.0
        %1541 = vmatpush1.msra.mxu0 0.0
        %1542 = vmatprep.subr.mxu0 0.0
        %1543 = vmatpush1.msra.mxu0 0.0
        %1544 = vmatprep.subr.mxu0 0.0
        %1545 = vmatpush1.msra.mxu0 0.0
        %1546 = vmatprep.subr.mxu0 0.0
        %1547 = vmatpush1.msra.mxu0 0.0
        %1548 = vmatprep.subr.mxu0 0.0
        %1549 = vmatpush1.msra.mxu0 0.0
        %1550 = vmatprep.subr.mxu0 0.0
        %1551 = vmatpush1.msra.mxu0 0.0
        %1552 = vmatprep.subr.mxu0 0.0
        %1553 = vmatpush1.msra.mxu0 0.0
        %1554 = vmatprep.subr.mxu0 0.0
        %1555 = vmatpush1.msra.mxu0 0.0
        %1556 = vmatprep.subr.mxu0 0.0
        %1557 = vmatpush1.msra.mxu0 0.0
        %1558 = vmatprep.subr.mxu0 0.0
        %1559 = vmatpush1.msra.mxu0 0.0
        %1560 = vmatprep.subr.mxu0 0.0
        %1561 = vmatpush1.msra.mxu0 0.0
        %1562 = vmatprep.subr.mxu0 0.0
        %1563 = vmatpush1.msra.mxu0 0.0
        %1564 = vmatprep.subr.mxu0 0.0
        %1565 = vmatpush1.msra.mxu0 0.0
        %1566 = vmatprep.subr.mxu0 0.0
        %1567 = vmatpush1.msra.mxu0 0.0
        %1568 = vmatprep.subr.mxu0 0.0
        %1569 = vmatpush1.msra.mxu0 0.0
        %1570 = vmatprep.subr.mxu0 0.0
        %1571 = vmatpush1.msra.mxu0 0.0
        %1572 = vmatprep.subr.mxu0 0.0
        %1573 = vmatpush1.msra.mxu0 0.0
        %1574 = vmatprep.subr.mxu0 0.0
        %1575 = vmatpush1.msra.mxu0 0.0
        %1576 = vmatprep.subr.mxu0 0.0
        %1577 = vmatpush1.msra.mxu0 0.0
        %1578 = vmatprep.subr.mxu0 0.0
        %1579 = vmatpush1.msra.mxu0 0.0
        %1580 = vmatprep.subr.mxu0 0.0
        %1581 = vmatpush1.msra.mxu0 0.0
        %1582 = vmatprep.subr.mxu0 0.0
        %1583 = vmatpush1.msra.mxu0 0.0
        %1584 = vmatprep.subr.mxu0 0.0
        %1585 = vmatpush1.msra.mxu0 0.0
        %1586 = vmatprep.subr.mxu0 0.0
        %1587 = vmatpush1.msra.mxu0 0.0
        %1588 = vmatprep.subr.mxu0 0.0
        %1589 = vmatpush1.msra.mxu0 0.0
        %1590 = vmatprep.subr.mxu0 0.0
        %1591 = vmatpush1.msra.mxu0 0.0
        %1592 = vmatprep.subr.mxu0 0.0
        %1593 = vmatpush1.msra.mxu0 0.0
        %1594 = vmatprep.subr.mxu0 0.0
        %1595 = vmatpush1.msra.mxu0 0.0
        %1596 = vmatprep.subr.mxu0 0.0
        %1597 = vmatpush1.msra.mxu0 0.0
        %1598 = vmatprep.subr.mxu0 0.0
        %1599 = vmatpush1.msra.mxu0 0.0
        %1600 = vmatprep.mubr.f32.mxu0 0.0
        %1601 = vmatmul.mubr.f32.gmra.mrb[0].mxu0 %v1509
        %v1602 = vpop.f32.mrb[0].mxu0
        %v1603 = vadd.f32 0.0, %v1602
        %v1604 = vpop.f32.mrb[0].mxu0
        %1605 = vmatprep.mubr.f32.mxu0 0.0
        %1606 = vmatmul.mubr.f32.gmra.mrb[0].mxu0 %v1512
        %v1607 = vpop.f32.mrb[0].mxu0
        %v1608 = vadd.f32 0.0, %v1607
        %v1609 = vpop.f32.mrb[0].mxu0
        %1610 = vmatprep.mubr.f32.mxu0 0.0
        %1611 = vmatmul.mubr.f32.gmra.mrb[0].mxu0 %v1515
        %v1612 = vpop.f32.mrb[0].mxu0
        %v1613 = vadd.f32 0.0, %v1612
        %v1614 = vpop.f32.mrb[0].mxu0
        %1615 = vmatprep.mubr.f32.mxu0 0.0
        %1616 = vmatmul.mubr.f32.gmra.mrb[0].mxu0 %v1518
        %v1617 = vpop.f32.mrb[0].mxu0
        %v1618 = vadd.f32 0.0, %v1617
        %v1619 = vpop.f32.mrb[0].mxu0
        %1620 = vmatprep.mubr.f32.mxu0 0.0
        %1621 = vmatmul.mubr.f32.gmra.mrb[0].mxu0 %v1521
        %v1622 = vpop.f32.mrb[0].mxu0
        %v1623 = vadd.f32 0.0, %v1622
        %v1624 = vpop.f32.mrb[0].mxu0
        %1625 = vmatprep.mubr.f32.mxu0 0.0
        %1626 = vmatmul.mubr.f32.gmra.mrb[0].mxu0 %v1524
        %v1627 = vpop.f32.mrb[0].mxu0
        %v1628 = vadd.f32 0.0, %v1627
        %v1629 = vpop.f32.mrb[0].mxu0
        %1630 = vmatprep.mubr.f32.mxu0 0.0
        %1631 = vmatmul.mubr.f32.gmra.mrb[0].mxu0 %v1527
        %v1632 = vpop.f32.mrb[0].mxu0
        %v1633 = vadd.f32 0.0, %v1632
        %v1634 = vpop.f32.mrb[0].mxu0
        %1635 = vmatprep.mubr.f32.mxu0 0.0
        %1636 = vmatmul.mubr.f32.gmra.mrb[0].mxu0 %v1530
        %v1637 = vpop.f32.mrb[0].mxu0
        %v1638 = vadd.f32 0.0, %v1637
        %v1639 = vpop.f32.mrb[0].mxu0
        %1640 = vdwg.mxu0
        %v1641 = vmul.f32 %v1603, %v981
        %v1642 = vmul.f32 %v1608, %v986
        %v1643 = vmul.f32 %v1613, %v991
        %v1644 = vmul.f32 %v1618, %v996
        %v1645 = vmul.f32 %v1623, %v1001
        %v1646 = vmul.f32 %v1628, %v1006
        %v1647 = vmul.f32 %v1633, %v1011
        %v1648 = vmul.f32 %v1638, %v1016
        %v1649 = vsel %vm703, %v1641, 0.0
        %v1650 = vrot.slane %v1649, 4
        %v1651 = vadd.f32 %v1649, %v1650
        %v1652 = vrot.slane %v1651, 2
        %v1653 = vadd.f32 %v1651, %v1652
        %v1654 = vrot.slane %v1653, 1
        %v1655 = vadd.f32 %v1653, %v1654
        %v1656 = vsel %vm703, %v1642, 0.0
        %v1657 = vrot.slane %v1656, 4
        %v1658 = vadd.f32 %v1656, %v1657
        %v1659 = vrot.slane %v1658, 2
        %v1660 = vadd.f32 %v1658, %v1659
        %v1661 = vrot.slane %v1660, 1
        %v1662 = vadd.f32 %v1660, %v1661
        %v1663 = vsel %vm703, %v1643, 0.0
        %v1664 = vrot.slane %v1663, 4
        %v1665 = vadd.f32 %v1663, %v1664
        %v1666 = vrot.slane %v1665, 2
        %v1667 = vadd.f32 %v1665, %v1666
        %v1668 = vrot.slane %v1667, 1
        %v1669 = vadd.f32 %v1667, %v1668
        %v1670 = vsel %vm703, %v1644, 0.0
        %v1671 = vrot.slane %v1670, 4
        %v1672 = vadd.f32 %v1670, %v1671
        %v1673 = vrot.slane %v1672, 2
        %v1674 = vadd.f32 %v1672, %v1673
        %v1675 = vrot.slane %v1674, 1
        %v1676 = vadd.f32 %v1674, %v1675
        %v1677 = vsel %vm703, %v1645, 0.0
        %v1678 = vrot.slane %v1677, 4
        %v1679 = vadd.f32 %v1677, %v1678
        %v1680 = vrot.slane %v1679, 2
        %v1681 = vadd.f32 %v1679, %v1680
        %v1682 = vrot.slane %v1681, 1
        %v1683 = vadd.f32 %v1681, %v1682
        %v1684 = vsel %vm703, %v1646, 0.0
        %v1685 = vrot.slane %v1684, 4
        %v1686 = vadd.f32 %v1684, %v1685
        %v1687 = vrot.slane %v1686, 2
        %v1688 = vadd.f32 %v1686, %v1687
        %v1689 = vrot.slane %v1688, 1
        %v1690 = vadd.f32 %v1688, %v1689
        %v1691 = vsel %vm703, %v1647, 0.0
        %v1692 = vrot.slane %v1691, 4
        %v1693 = vadd.f32 %v1691, %v1692
        %v1694 = vrot.slane %v1693, 2
        %v1695 = vadd.f32 %v1693, %v1694
        %v1696 = vrot.slane %v1695, 1
        %v1697 = vadd.f32 %v1695, %v1696
        %v1698 = vsel %vm703, %v1648, 0.0
        %v1699 = vrot.slane %v1698, 4
        %v1700 = vadd.f32 %v1698, %v1699
        %v1701 = vrot.slane %v1700, 2
        %v1702 = vadd.f32 %v1700, %v1701
        %v1703 = vrot.slane %v1702, 1
        %v1704 = vadd.f32 %v1702, %v1703
        %v1705 = vld [vmem:[%s9] sm:$0xff]
        %v1706 = vld [vmem:[%s9 + $0x8] sm:$0xff]
        %v1707 = vld [vmem:[%s9 + $0x10] sm:$0xff]
        %v1708 = vld [vmem:[%s9 + $0x18] sm:$0xff]
        %vm1717 = vcmask 1041409
        %v1718 = vsel %vm1717, %v1662, %v1655
        %vm1719 = vcmask 1042434
        %v1720 = vsel %vm1719, %v1669, %v1718
        %vm1721 = vcmask 1043459
        %v1722 = vsel %vm1721, %v1676, %v1720
        %vm1723 = vcmask 1044484
        %v1724 = vsel %vm1723, %v1683, %v1722
        %vm1725 = vcmask 1045509
        %v1726 = vsel %vm1725, %v1690, %v1724
        %vm1727 = vcmask 1046534
        %v1728 = vsel %vm1727, %v1697, %v1726
        %vm1729 = vcmask 1047559
        %v1730 = vsel %vm1729, %v1704, %v1728
        %v1731 = vsel %vm703, %v1730, 0
        %1733 = vmatprep.subr.mxu0 0.0
        %1734 = vmatpush1.msra.mxu0 %v1705
        %1735 = vmatprep.subr.mxu0 0.0
        %1736 = vmatpush1.msra.mxu0 %v1706
        %1737 = vmatprep.subr.mxu0 0.0
        %1738 = vmatpush1.msra.mxu0 %v1707
        %1739 = vmatprep.subr.mxu0 0.0
        %1740 = vmatpush1.msra.mxu0 %v1708
        %1741 = vmatprep.subr.mxu0 0.0
        %1742 = vmatpush1.msra.mxu0 0.0
        %1743 = vmatprep.subr.mxu0 0.0
        %1744 = vmatpush1.msra.mxu0 0.0
        %1745 = vmatprep.subr.mxu0 0.0
        %1746 = vmatpush1.msra.mxu0 0.0
        %1747 = vmatprep.subr.mxu0 0.0
        %1748 = vmatpush1.msra.mxu0 0.0
        %1749 = vmatprep.subr.mxu0 0.0
        %1750 = vmatpush1.msra.mxu0 0.0
        %1751 = vmatprep.subr.mxu0 0.0
        %1752 = vmatpush1.msra.mxu0 0.0
        %1753 = vmatprep.subr.mxu0 0.0
        %1754 = vmatpush1.msra.mxu0 0.0
        %1755 = vmatprep.subr.mxu0 0.0
        %1756 = vmatpush1.msra.mxu0 0.0
        %1757 = vmatprep.subr.mxu0 0.0
        %1758 = vmatpush1.msra.mxu0 0.0
        %1759 = vmatprep.subr.mxu0 0.0
        %1760 = vmatpush1.msra.mxu0 0.0
        %1761 = vmatprep.subr.mxu0 0.0
        %1762 = vmatpush1.msra.mxu0 0.0
        %1763 = vmatprep.subr.mxu0 0.0
        %1764 = vmatpush1.msra.mxu0 0.0
        %1765 = vmatprep.subr.mxu0 0.0
        %1766 = vmatpush1.msra.mxu0 0.0
        %1767 = vmatprep.subr.mxu0 0.0
        %1768 = vmatpush1.msra.mxu0 0.0
        %1769 = vmatprep.subr.mxu0 0.0
        %1770 = vmatpush1.msra.mxu0 0.0
        %1771 = vmatprep.subr.mxu0 0.0
        %1772 = vmatpush1.msra.mxu0 0.0
        %1773 = vmatprep.subr.mxu0 0.0
        %1774 = vmatpush1.msra.mxu0 0.0
        %1775 = vmatprep.subr.mxu0 0.0
        %1776 = vmatpush1.msra.mxu0 0.0
        %1777 = vmatprep.subr.mxu0 0.0
        %1778 = vmatpush1.msra.mxu0 0.0
        %1779 = vmatprep.subr.mxu0 0.0
        %1780 = vmatpush1.msra.mxu0 0.0
        %1781 = vmatprep.subr.mxu0 0.0
        %1782 = vmatpush1.msra.mxu0 0.0
        %1783 = vmatprep.subr.mxu0 0.0
        %1784 = vmatpush1.msra.mxu0 0.0
        %1785 = vmatprep.subr.mxu0 0.0
        %1786 = vmatpush1.msra.mxu0 0.0
        %1787 = vmatprep.subr.mxu0 0.0
        %1788 = vmatpush1.msra.mxu0 0.0
        %1789 = vmatprep.subr.mxu0 0.0
        %1790 = vmatpush1.msra.mxu0 0.0
        %1791 = vmatprep.subr.mxu0 0.0
        %1792 = vmatpush1.msra.mxu0 0.0
        %1793 = vmatprep.subr.mxu0 0.0
        %1794 = vmatpush1.msra.mxu0 0.0
        %1795 = vmatprep.subr.mxu0 0.0
        %1796 = vmatpush1.msra.mxu0 0.0
        %1797 = vmatprep.mubr.f32.mxu0 0.0
        %1798 = vmatmul.mubr.f32.gmra.mrb[0].mxu0 %v1731
        %v1799 = vpop.f32.mrb[0].mxu0
        %v1800 = vadd.f32 0.0, %v1799
        %v1801 = vpop.f32.mrb[0].mxu0
        %1802 = vdwg.mxu0
        %v1803 = vadd.f32 %v688, %v1800
        %v1804 = vld [vmem:[%s10] sm:$0x1]
        %v1805 = vld [vmem:[%s11] sm:$0x1]
        %v1806 = vsel %vm703, %v1803, 0.0
        %1807 = vadd.xlane.f32.xlu0 %v1806
        %v1808 = vpop.xlane.xlu0 %1807
        %v1809 = vmul.f32 %v1803, %v1803
        %v1810 = vsel %vm703, %v1809, 0.0
        %1811 = vadd.xlane.f32.xlu0 %v1810
        %v1812 = vpop.xlane.xlu0 %1811
        %v1813 = vmul.f32 %v1808, 0.03125
        %v1814 = vmul.f32 %v1808, %v1813
        %v1815 = vsub.f32 %v1812, %v1814
        %v1816 = vmax.f32 %v1815, 0.0
        %v1817 = vmul.f32 %v1816, 0.032258064
        %v1818 = vadd.f32 %v1817, 1e-06
        %v1819 = vrsqrt.pop %v1818
        %v1820 = vmul.f32 %v1818, %v1819
        %vm1821 = vcmp.eq.f32.partialorder %v1818, inf
        %v1822 = vsel %vm1821, %v1818, %v1820
        %vm1823 = vcmp.eq.f32.partialorder %v1818, 0.0
        %v1824 = vand.u32 %v1818, 2147483648
        %v1825 = vsel %vm1823, %v1824, %v1822
        %v1826 = vsub.f32 %v1803, %v1813
        %v1828 = vlaneseq
        %v1829 = vshrl.u32 %v1828, 7
        %v1830 = vsub.s32 0, %v1829
        %v1831 = vrot.slane %v1804, %v1830
        %v1833 = vmul.f32 %v1831, %v1826
        %v1834 = vadd.f32 %v1825, 1e-06
        %v1835 = vrcp.pop %v1834
        %v1836 = vmul.f32 %v1833, %v1835
        %v1838 = vlaneseq
        %v1839 = vshrl.u32 %v1838, 7
        %v1840 = vsub.s32 0, %v1839
        %v1841 = vrot.slane %v1805, %v1840
        %v1843 = vadd.f32 %v1836, %v1841
        %v1844 = vld [vmem:[%s14] sm:$0xff]
        %v1845 = vld [vmem:[%s14 + $0x8] sm:$0xff]
        %v1846 = vld [vmem:[%s14 + $0x10] sm:$0xff]
        %v1847 = vld [vmem:[%s14 + $0x18] sm:$0xff]
        %v1848 = vld [vmem:[%s15] sm:$0x1]
        %v1850 = vlaneseq
        %v1851 = vshrl.u32 %v1850, 7
        %v1852 = vsub.s32 0, %v1851
        %v1853 = vrot.slane %v1848, %v1852
        %v1856 = vsel %vm703, %v1843, 0
        %1858 = vmatprep.subr.mxu0 0.0
        %1859 = vmatpush1.msra.mxu0 %v1844
        %1860 = vmatprep.subr.mxu0 0.0
        %1861 = vmatpush1.msra.mxu0 %v1845
        %1862 = vmatprep.subr.mxu0 0.0
        %1863 = vmatpush1.msra.mxu0 %v1846
        %1864 = vmatprep.subr.mxu0 0.0
        %1865 = vmatpush1.msra.mxu0 %v1847
        %1866 = vmatprep.subr.mxu0 0.0
        %1867 = vmatpush1.msra.mxu0 0.0
        %1868 = vmatprep.subr.mxu0 0.0
        %1869 = vmatpush1.msra.mxu0 0.0
        %1870 = vmatprep.subr.mxu0 0.0
        %1871 = vmatpush1.msra.mxu0 0.0
        %1872 = vmatprep.subr.mxu0 0.0
        %1873 = vmatpush1.msra.mxu0 0.0
        %1874 = vmatprep.subr.mxu0 0.0
        %1875 = vmatpush1.msra.mxu0 0.0
        %1876 = vmatprep.subr.mxu0 0.0
        %1877 = vmatpush1.msra.mxu0 0.0
        %1878 = vmatprep.subr.mxu0 0.0
        %1879 = vmatpush1.msra.mxu0 0.0
        %1880 = vmatprep.subr.mxu0 0.0
        %1881 = vmatpush1.msra.mxu0 0.0
        %1882 = vmatprep.subr.mxu0 0.0
        %1883 = vmatpush1.msra.mxu0 0.0
        %1884 = vmatprep.subr.mxu0 0.0
        %1885 = vmatpush1.msra.mxu0 0.0
        %1886 = vmatprep.subr.mxu0 0.0
        %1887 = vmatpush1.msra.mxu0 0.0
        %1888 = vmatprep.subr.mxu0 0.0
        %1889 = vmatpush1.msra.mxu0 0.0
        %1890 = vmatprep.subr.mxu0 0.0
        %1891 = vmatpush1.msra.mxu0 0.0
        %1892 = vmatprep.subr.mxu0 0.0
        %1893 = vmatpush1.msra.mxu0 0.0
        %1894 = vmatprep.subr.mxu0 0.0
        %1895 = vmatpush1.msra.mxu0 0.0
        %1896 = vmatprep.subr.mxu0 0.0
        %1897 = vmatpush1.msra.mxu0 0.0
        %1898 = vmatprep.subr.mxu0 0.0
        %1899 = vmatpush1.msra.mxu0 0.0
        %1900 = vmatprep.subr.mxu0 0.0
        %1901 = vmatpush1.msra.mxu0 0.0
        %1902 = vmatprep.subr.mxu0 0.0
        %1903 = vmatpush1.msra.mxu0 0.0
        %1904 = vmatprep.subr.mxu0 0.0
        %1905 = vmatpush1.msra.mxu0 0.0
        %1906 = vmatprep.subr.mxu0 0.0
        %1907 = vmatpush1.msra.mxu0 0.0
        %1908 = vmatprep.subr.mxu0 0.0
        %1909 = vmatpush1.msra.mxu0 0.0
        %1910 = vmatprep.subr.mxu0 0.0
        %1911 = vmatpush1.msra.mxu0 0.0
        %1912 = vmatprep.subr.mxu0 0.0
        %1913 = vmatpush1.msra.mxu0 0.0
        %1914 = vmatprep.subr.mxu0 0.0
        %1915 = vmatpush1.msra.mxu0 0.0
        %1916 = vmatprep.subr.mxu0 0.0
        %1917 = vmatpush1.msra.mxu0 0.0
        %1918 = vmatprep.subr.mxu0 0.0
        %1919 = vmatpush1.msra.mxu0 0.0
        %1920 = vmatprep.subr.mxu0 0.0
        %1921 = vmatpush1.msra.mxu0 0.0
        %1922 = vmatprep.mubr.f32.mxu0 0.0
        %1923 = vmatmul.mubr.f32.gmra.mrb[0].mxu0 %v1856
        %v1924 = vpop.f32.mrb[0].mxu0
        %v1925 = vadd.f32 %v1853, %v1924
        %v1926 = vpop.f32.mrb[0].mxu0
        %1927 = vdwg.mxu0
        %v1928 = vmax.f32 %v1925, 0.0
        %v1929 = vld [vmem:[%s16] sm:$0xff]
        %v1930 = vld [vmem:[%s16 + $0x8] sm:$0xff]
        %v1931 = vld [vmem:[%s16 + $0x10] sm:$0xff]
        %v1932 = vld [vmem:[%s16 + $0x18] sm:$0xff]
        %v1933 = vld [vmem:[%s16 + $0x20] sm:$0xff]
        %v1934 = vld [vmem:[%s16 + $0x28] sm:$0xff]
        %v1935 = vld [vmem:[%s16 + $0x30] sm:$0xff]
        %v1936 = vld [vmem:[%s16 + $0x38] sm:$0xff]
        %v1937 = vld [vmem:[%s16 + $0x40] sm:$0xff]
        %v1938 = vld [vmem:[%s16 + $0x48] sm:$0xff]
        %v1939 = vld [vmem:[%s16 + $0x50] sm:$0xff]
        %v1940 = vld [vmem:[%s16 + $0x58] sm:$0xff]
        %v1941 = vld [vmem:[%s16 + $0x60] sm:$0xff]
        %v1942 = vld [vmem:[%s16 + $0x68] sm:$0xff]
        %v1943 = vld [vmem:[%s16 + $0x70] sm:$0xff]
        %v1944 = vld [vmem:[%s16 + $0x78] sm:$0xff]
        %v1945 = vld [vmem:[%s17] sm:$0x1]
        %v1947 = vlaneseq
        %v1948 = vshrl.u32 %v1947, 7
        %v1949 = vsub.s32 0, %v1948
        %v1950 = vrot.slane %v1945, %v1949
        %1952 = vmatprep.subr.mxu0 0.0
        %1953 = vmatpush1.msra.mxu0 %v1929
        %1954 = vmatprep.subr.mxu0 0.0
        %1955 = vmatpush1.msra.mxu0 %v1930
        %1956 = vmatprep.subr.mxu0 0.0
        %1957 = vmatpush1.msra.mxu0 %v1931
        %1958 = vmatprep.subr.mxu0 0.0
        %1959 = vmatpush1.msra.mxu0 %v1932
        %1960 = vmatprep.subr.mxu0 0.0
        %1961 = vmatpush1.msra.mxu0 %v1933
        %1962 = vmatprep.subr.mxu0 0.0
        %1963 = vmatpush1.msra.mxu0 %v1934
        %1964 = vmatprep.subr.mxu0 0.0
        %1965 = vmatpush1.msra.mxu0 %v1935
        %1966 = vmatprep.subr.mxu0 0.0
        %1967 = vmatpush1.msra.mxu0 %v1936
        %1968 = vmatprep.subr.mxu0 0.0
        %1969 = vmatpush1.msra.mxu0 %v1937
        %1970 = vmatprep.subr.mxu0 0.0
        %1971 = vmatpush1.msra.mxu0 %v1938
        %1972 = vmatprep.subr.mxu0 0.0
        %1973 = vmatpush1.msra.mxu0 %v1939
        %1974 = vmatprep.subr.mxu0 0.0
        %1975 = vmatpush1.msra.mxu0 %v1940
        %1976 = vmatprep.subr.mxu0 0.0
        %1977 = vmatpush1.msra.mxu0 %v1941
        %1978 = vmatprep.subr.mxu0 0.0
        %1979 = vmatpush1.msra.mxu0 %v1942
        %1980 = vmatprep.subr.mxu0 0.0
        %1981 = vmatpush1.msra.mxu0 %v1943
        %1982 = vmatprep.subr.mxu0 0.0
        %1983 = vmatpush1.msra.mxu0 %v1944
        %1984 = vmatprep.subr.mxu0 0.0
        %1985 = vmatpush1.msra.mxu0 0.0
        %1986 = vmatprep.subr.mxu0 0.0
        %1987 = vmatpush1.msra.mxu0 0.0
        %1988 = vmatprep.subr.mxu0 0.0
        %1989 = vmatpush1.msra.mxu0 0.0
        %1990 = vmatprep.subr.mxu0 0.0
        %1991 = vmatpush1.msra.mxu0 0.0
        %1992 = vmatprep.subr.mxu0 0.0
        %1993 = vmatpush1.msra.mxu0 0.0
        %1994 = vmatprep.subr.mxu0 0.0
        %1995 = vmatpush1.msra.mxu0 0.0
        %1996 = vmatprep.subr.mxu0 0.0
        %1997 = vmatpush1.msra.mxu0 0.0
        %1998 = vmatprep.subr.mxu0 0.0
        %1999 = vmatpush1.msra.mxu0 0.0
        %2000 = vmatprep.subr.mxu0 0.0
        %2001 = vmatpush1.msra.mxu0 0.0
        %2002 = vmatprep.subr.mxu0 0.0
        %2003 = vmatpush1.msra.mxu0 0.0
        %2004 = vmatprep.subr.mxu0 0.0
        %2005 = vmatpush1.msra.mxu0 0.0
        %2006 = vmatprep.subr.mxu0 0.0
        %2007 = vmatpush1.msra.mxu0 0.0
        %2008 = vmatprep.subr.mxu0 0.0
        %2009 = vmatpush1.msra.mxu0 0.0
        %2010 = vmatprep.subr.mxu0 0.0
        %2011 = vmatpush1.msra.mxu0 0.0
        %2012 = vmatprep.subr.mxu0 0.0
        %2013 = vmatpush1.msra.mxu0 0.0
        %2014 = vmatprep.subr.mxu0 0.0
        %2015 = vmatpush1.msra.mxu0 0.0
        %2016 = vmatprep.mubr.f32.mxu0 0.0
        %2017 = vmatmul.mubr.f32.gmra.mrb[0].mxu0 %v1928
        %v2018 = vpop.f32.mrb[0].mxu0
        %v2019 = vadd.f32 %v1950, %v2018
        %v2020 = vpop.f32.mrb[0].mxu0
        %2021 = vdwg.mxu0
        %v2022 = vadd.f32 %v1843, %v2019
        %v2023 = vld [vmem:[%s12] sm:$0x1]
        %v2024 = vld [vmem:[%s13] sm:$0x1]
        %v2025 = vsel %vm703, %v2022, 0.0
        %2026 = vadd.xlane.f32.xlu0 %v2025
        %v2027 = vpop.xlane.xlu0 %2026
        %v2028 = vmul.f32 %v2022, %v2022
        %v2029 = vsel %vm703, %v2028, 0.0
        %2030 = vadd.xlane.f32.xlu0 %v2029
        %v2031 = vpop.xlane.xlu0 %2030
        %v2032 = vmul.f32 %v2027, 0.03125
        %v2033 = vmul.f32 %v2027, %v2032
        %v2034 = vsub.f32 %v2031, %v2033
        %v2035 = vmax.f32 %v2034, 0.0
        %v2036 = vmul.f32 %v2035, 0.032258064
        %v2037 = vadd.f32 %v2036, 1e-06
        %v2038 = vrsqrt.pop %v2037
        %v2039 = vmul.f32 %v2037, %v2038
        %vm2040 = vcmp.eq.f32.partialorder %v2037, inf
        %v2041 = vsel %vm2040, %v2037, %v2039
        %vm2042 = vcmp.eq.f32.partialorder %v2037, 0.0
        %v2043 = vand.u32 %v2037, 2147483648
        %v2044 = vsel %vm2042, %v2043, %v2041
        %v2045 = vsub.f32 %v2022, %v2032
        %v2047 = vlaneseq
        %v2048 = vshrl.u32 %v2047, 7
        %v2049 = vsub.s32 0, %v2048
        %v2050 = vrot.slane %v2023, %v2049
        %v2052 = vmul.f32 %v2050, %v2045
        %v2053 = vadd.f32 %v2044, 1e-06
        %v2054 = vrcp.pop %v2053
        %v2055 = vmul.f32 %v2052, %v2054
        %v2057 = vlaneseq
        %v2058 = vshrl.u32 %v2057, 7
        %v2059 = vsub.s32 0, %v2058
        %v2060 = vrot.slane %v2024, %v2059
        %v2062 = vadd.f32 %v2055, %v2060
        %2064 = vset.pattern.permute.xlu0 0
        %2065 = vperm.xlu0 %2064, %v698
        %v2066 = vpop.permute.xlu0 %2065
        %v2068 = vmul.f32 %v2066, %v2062
        %2069 = vst.msk [vmem:[%s656] sm:$0xff] %vm703, %v2068
        %s2070 = sand.u32 %s460, 1
        %s2071 = scalar_lea.sflag [#allocation3], %s2070
        %s2072 = sand.u32 %s460, 1
        %s2073 = smul.addr %s2072, 8
        %s2074 = scalar_lea.vmem [#allocation2], %s2073
        // Predicated region
        $region93: #{tpu_custom_call.1} parent=91 // pred_check
          %p2075 = pneg %p470
        $region94: #{tpu_custom_call.1} parent=91 // pred_check_branch
          %2077 = sbr.rel (%p2075) target = $region96
        $region95: #{tpu_custom_call.1} parent=91 // pred_region
          %s2079 = ssub.s32 128, 128
          %2080 = vsyncadd %s2071, %s2079
          %s2081 = sadd.s32 %s37, %s36
          %s2082 = smul.addr %s2081, 128
          %s2083 = scalar_lea.hbm %s18, %s2082
          %s2085 = sshll.u32 %s2074, 4
          %s2086 = int_to_ptr.vmem [resolvable:$true] %s2085
          %2088 = dma.vmem_to_hbm [thread:$0]  %s2086, 128, %s2083, %s2071
        $region96: #{tpu_custom_call.1} parent=91 // pred_fallthru
          _
      $region92: #{tpu_custom_call.1} parent=5 // pred_fallthru
        _
      %p2089 = scmp.le.s32.totalorder 2, %s27
      // Predicated region
      $region97: #{tpu_custom_call.1} parent=5 // pred_check
        %p2090 = pneg %p2089
      $region98: #{tpu_custom_call.1} parent=5 // pred_check_branch
        %2092 = sbr.rel (%p2090) target = $region100
      $region99: #{tpu_custom_call.1} parent=5 // pred_region
        %s2093 = ssub.s32 %s27, 2
        // Predicated region
        $region101: #{tpu_custom_call.1} parent=99 // pred_check
          %p2094 = pneg %p476
        $region102: #{tpu_custom_call.1} parent=99 // pred_check_branch
          %2096 = sbr.rel (%p2094) target = $region104
        $region103: #{tpu_custom_call.1} parent=99 // pred_region
          %s2097 = sand.u32 %s461, 1
          %s2098 = scalar_lea.sflag [#allocation3], %s2097
          %s2099 = sand.u32 %s461, 1
          %s2100 = smul.addr %s2099, 8
          %s2101 = scalar_lea.vmem [#allocation2], %s2100
          %2102 = dma.done %s2098, 128
        $region104: #{tpu_custom_call.1} parent=99 // pred_fallthru
          _
      $region100: #{tpu_custom_call.1} parent=5 // pred_fallthru
        _
    $region6: #{tpu_custom_call.1} parent=1 // loop_footer
      %s31 = sadd.s32 1, %s27
    $region7: #{tpu_custom_call.1} parent=1 // loop_footer_branch
      %26 = sbr.rel target = $region3
    $region8: #{tpu_custom_call.1} parent=1 // loop_exit
      _
    %2103 = vsyncpa [#allocation3], 1
    %s2104 = scalar_lea.sflag [#allocation3], 1
    %2105 = vsyncpa %s2104, 1

</llo_original>
